<compile_context>
chip_gen: v6e
topology: v6e:2x2x1
jax: 0.10.0
libtpu: 0.0.40
codegen_flags: <defaults>
</compile_context>

<pallas_src>
import jax
import jax.numpy as jnp
from jax import lax
from jax.experimental import pallas as pl
from jax.experimental.pallas import tpu as pltpu

HIDDEN = 8


def critic_kernel(x_ref, h0_ref, wih_ref, whh_ref, bih_ref, bhh_ref,
                  wout_ref, bout_ref, o_ref):
    """Whole forward pass in one kernel invocation (shapes are tiny -> no grid).

    Layout: batch on lanes, features on sublanes.
      x_ref:   (T, B)    input sequence (input_size == 1, squeezed), time-major
      h0_ref:  (H, B)    initial hidden state (transposed)
      wih_ref: (3H, 1)   input->gates weights (PyTorch weight_ih_l0)
      whh_ref: (3H, H)   hidden->gates weights (PyTorch weight_hh_l0)
      bih_ref: (3H, 1)   input bias
      bhh_ref: (3H, 1)   hidden bias
      wout_ref:(H, 1)    linear head weight (transposed)
      bout_ref:(1, 1)    linear head bias
      o_ref:   (1, B)    output (lane-dense; wrapper transposes back to (B, 1))

    Gate row order = [r, z, n] (PyTorch convention).
    """
    H = HIDDEN
    T, B = x_ref.shape

    x_all = x_ref[...]          # (T, B)
    h = h0_ref[...]             # (H, B)
    wih = wih_ref[...]          # (3H, 1)
    whh = whh_ref[...]          # (3H, H)
    b_ih = bih_ref[...]         # (3H, 1)
    b_hh = bhh_ref[...]         # (3H, 1)

    def lane_b(col):            # (k, 1) -> (k, B) lane broadcast (hoisted use only)
        return jnp.broadcast_to(col, (col.shape[0], B))

    # ---- hoisted, loop-invariant broadcasts (emitted exactly once) ----
    wih_r_b = lane_b(wih[0:H, :])
    wih_z_b = lane_b(wih[H:2 * H, :])
    wih_n_b = lane_b(wih[2 * H:3 * H, :])

    # fold b_ih + b_hh for r and z; keep b_hn separate (inside the r-gated term)
    brz = b_ih[0:2 * H, :] + b_hh[0:2 * H, :]
    b_r_b = lane_b(brz[0:H, :])
    b_z_b = lane_b(brz[H:2 * H, :])
    b_in_b = lane_b(b_ih[2 * H:3 * H, :])
    b_hn_b = lane_b(b_hh[2 * H:3 * H, :])

    # lane-broadcast of every W_hh contraction column, per gate (3 * H vregs)
    Wr = [lane_b(whh[0:H, k:k + 1]) for k in range(H)]
    Wz = [lane_b(whh[H:2 * H, k:k + 1]) for k in range(H)]
    Wn = [lane_b(whh[2 * H:3 * H, k:k + 1]) for k in range(H)]

    wout_b = lane_b(wout_ref[...])            # (H, B)

    # ---- fully unrolled recurrence (T is a static Python int) ----
    for t in range(T):
        # input projection: input_size == 1 -> broadcasted multiply (off the h chain)
        x_t = jnp.broadcast_to(x_all[t:t + 1, :], (H, B))     # sublane broadcast
        gi_r = wih_r_b * x_t + b_r_b
        gi_z = wih_z_b * x_t + b_z_b
        gi_n = wih_n_b * x_t + b_in_b

        # gh_g = W_hh_g @ h as 8 rank-1 VPU FMAs per gate (no MXU)
        h_rows = [jnp.broadcast_to(h[k:k + 1, :], (H, B)) for k in range(H)]
        gh_r = Wr[0] * h_rows[0]
        gh_z = Wz[0] * h_rows[0]
        gh_n = b_hn_b + Wn[0] * h_rows[0]
        for k in range(1, H):
            gh_r = gh_r + Wr[k] * h_rows[k]
            gh_z = gh_z + Wz[k] * h_rows[k]
            gh_n = gh_n + Wn[k] * h_rows[k]

        r = jax.nn.sigmoid(gi_r + gh_r)
        z = jax.nn.sigmoid(gi_z + gh_z)
        n = jnp.tanh(gi_n + r * gh_n)
        h = n + z * (h - n)               # == (1 - z) * n + z * h

    # ---- linear head: elementwise mul + sublane reduce, lane-dense (1, B) store ----
    o_ref[...] = jnp.sum(h * wout_b, axis=0, keepdims=True) + bout_ref[...]


def critic_forward(x, h0, params):
    """x: (B, T) float32 (matches the module's (batch, seq) input); h0: (B, H)."""
    B, T = x.shape
    H = HIDDEN
    assert B <= 128, "single-invocation kernel holds the batch on the lane axis"
    # TODO(synk): for B > 128 add a batch grid axis with
    # compiler_params=pltpu.CompilerParams(dimension_semantics=("parallel",)) so it
    # shards across v7x's 2 TensorCores.

    # layout prep (tiny, outside the kernel): batch -> lanes, time -> leading axis
    x_tb = x.T                                      # (T, B)
    h0_hb = h0.T                                    # (H, B)
    b_ih = params["b_ih"].reshape(3 * H, 1)
    b_hh = params["b_hh"].reshape(3 * H, 1)
    w_out = params["w_out"].T                       # (H, 1)
    b_out = params["b_out"].reshape(1, 1)

    vmem = pl.BlockSpec(memory_space=pltpu.MemorySpace.VMEM)
    out_lb = pl.pallas_call(
        critic_kernel,
        out_shape=jax.ShapeDtypeStruct((1, B), jnp.float32),
        in_specs=[vmem] * 8,
        out_specs=vmem,
    )(x_tb, h0_hb, params["w_ih"], params["w_hh"], b_ih, b_hh, w_out, b_out)
    return out_lb.T                                 # (B, 1), module output shape


def init_params(key):
    """Deterministic init matching PyTorch shapes (uniform(-1/sqrt(H), 1/sqrt(H)))."""
    H = HIDDEN
    bound = 1.0 / jnp.sqrt(jnp.float32(H))
    ks = jax.random.split(key, 6)
    u = lambda k, shape: jax.random.uniform(k, shape, jnp.float32, -bound, bound)
    return {
        "w_ih": u(ks[0], (3 * H, 1)),    # PyTorch weight_ih_l0 (3H, input_size=1)
        "w_hh": u(ks[1], (3 * H, H)),    # PyTorch weight_hh_l0
        "b_ih": u(ks[2], (3 * H,)),
        "b_hh": u(ks[3], (3 * H,)),
        "w_out": u(ks[4], (1, H)),       # PyTorch Linear weight
        "b_out": u(ks[5], (1,)),
    }


def critic_reference(x, h0, params):
    """Pure-JAX reference of the same forward (for correctness check)."""
    H = HIDDEN
    w_ih = params["w_ih"][:, 0]          # (3H,)

    def step(h, x_t):                    # h: (B, H), x_t: (B,)
        gi = x_t[:, None] * w_ih[None, :] + params["b_ih"][None, :]       # (B, 3H)
        gh = h @ params["w_hh"].T + params["b_hh"][None, :]               # (B, 3H)
        r = jax.nn.sigmoid(gi[:, 0:H] + gh[:, 0:H])
        z = jax.nn.sigmoid(gi[:, H:2 * H] + gh[:, H:2 * H])
        n = jnp.tanh(gi[:, 2 * H:3 * H] + r * gh[:, 2 * H:3 * H])
        return (1.0 - z) * n + z * h, None

    h_last, _ = lax.scan(step, h0, x.T)  # scan over time
    return h_last @ params["w_out"].T + params["b_out"][None, :]


if __name__ == "__main__":
    B, T = 4, 8  # batch, sequence length (input feature dim is 1, as in the module)

    root = jax.random.PRNGKey(0)
    k_params, k_x, k_h = jax.random.split(root, 3)

    params = init_params(k_params)
    x = jax.random.normal(k_x, (B, T), dtype=jnp.float32)
    # torch.rand(num_layers, B, 8) in forward(): deterministic uniform[0,1) stand-in,
    # generated outside the kernel (num_layers == 1 -> squeeze layer axis).
    h0 = jax.random.uniform(k_h, (1, B, HIDDEN), dtype=jnp.float32)[0]

    out = critic_forward(x, h0, params)
    out = jax.block_until_ready(out)

    ref = critic_reference(x, h0, params)
    assert out.shape == (B, 1)
    assert jnp.allclose(out, ref, atol=1e-5, rtol=1e-5), (out, ref)

    print("KERNEL_OK")
</pallas_src>

<mosaic_0001>
module attributes {stable_mosaic.version = 11 : i64} {
  func.func @critic_kernel(%arg0: memref<8x4xf32, #tpu.memory_space<vmem>>, %arg1: memref<8x4xf32, #tpu.memory_space<vmem>>, %arg2: memref<24x1xf32, #tpu.memory_space<vmem>>, %arg3: memref<24x8xf32, #tpu.memory_space<vmem>>, %arg4: memref<24x1xf32, #tpu.memory_space<vmem>>, %arg5: memref<24x1xf32, #tpu.memory_space<vmem>>, %arg6: memref<8x1xf32, #tpu.memory_space<vmem>>, %arg7: memref<1x1xf32, #tpu.memory_space<vmem>>, %arg8: memref<1x4xf32, #tpu.memory_space<vmem>>) attributes {dimension_semantics = [], scalar_prefetch = 0 : i64, scratch_operands = 0 : i64, tpu.core_type = #tpu.core_type<tc>} {
    %c0 = arith.constant 0 : index
    %c0_0 = arith.constant 0 : index
    %0 = vector.load %arg0[%c0, %c0_0] : memref<8x4xf32, #tpu.memory_space<vmem>>, vector<8x4xf32>
    %c0_1 = arith.constant 0 : index
    %c0_2 = arith.constant 0 : index
    %1 = vector.load %arg1[%c0_1, %c0_2] : memref<8x4xf32, #tpu.memory_space<vmem>>, vector<8x4xf32>
    %c0_3 = arith.constant 0 : index
    %c0_4 = arith.constant 0 : index
    %2 = vector.load %arg2[%c0_3, %c0_4] : memref<24x1xf32, #tpu.memory_space<vmem>>, vector<24x1xf32>
    %c0_5 = arith.constant 0 : index
    %c0_6 = arith.constant 0 : index
    %3 = vector.load %arg3[%c0_5, %c0_6] : memref<24x8xf32, #tpu.memory_space<vmem>>, vector<24x8xf32>
    %c0_7 = arith.constant 0 : index
    %c0_8 = arith.constant 0 : index
    %4 = vector.load %arg4[%c0_7, %c0_8] : memref<24x1xf32, #tpu.memory_space<vmem>>, vector<24x1xf32>
    %c0_9 = arith.constant 0 : index
    %c0_10 = arith.constant 0 : index
    %5 = vector.load %arg5[%c0_9, %c0_10] : memref<24x1xf32, #tpu.memory_space<vmem>>, vector<24x1xf32>
    %6 = vector.extract_strided_slice %2 {offsets = [0, 0], sizes = [8, 1], strides = [1, 1]} : vector<24x1xf32> to vector<8x1xf32>
    %7 = vector.shape_cast %6 : vector<8x1xf32> to vector<8x1xf32>
    %8 = vector.broadcast %7 : vector<8x1xf32> to vector<8x4xf32>
    %9 = vector.extract_strided_slice %2 {offsets = [8, 0], sizes = [8, 1], strides = [1, 1]} : vector<24x1xf32> to vector<8x1xf32>
    %10 = vector.shape_cast %9 : vector<8x1xf32> to vector<8x1xf32>
    %11 = vector.broadcast %10 : vector<8x1xf32> to vector<8x4xf32>
    %12 = vector.extract_strided_slice %2 {offsets = [16, 0], sizes = [8, 1], strides = [1, 1]} : vector<24x1xf32> to vector<8x1xf32>
    %13 = vector.shape_cast %12 : vector<8x1xf32> to vector<8x1xf32>
    %14 = vector.broadcast %13 : vector<8x1xf32> to vector<8x4xf32>
    %15 = vector.extract_strided_slice %4 {offsets = [0, 0], sizes = [16, 1], strides = [1, 1]} : vector<24x1xf32> to vector<16x1xf32>
    %16 = vector.extract_strided_slice %5 {offsets = [0, 0], sizes = [16, 1], strides = [1, 1]} : vector<24x1xf32> to vector<16x1xf32>
    %17 = arith.addf %15, %16 : vector<16x1xf32>
    %18 = vector.extract_strided_slice %17 {offsets = [0, 0], sizes = [8, 1], strides = [1, 1]} : vector<16x1xf32> to vector<8x1xf32>
    %19 = vector.shape_cast %18 : vector<8x1xf32> to vector<8x1xf32>
    %20 = vector.broadcast %19 : vector<8x1xf32> to vector<8x4xf32>
    %21 = vector.extract_strided_slice %17 {offsets = [8, 0], sizes = [8, 1], strides = [1, 1]} : vector<16x1xf32> to vector<8x1xf32>
    %22 = vector.shape_cast %21 : vector<8x1xf32> to vector<8x1xf32>
    %23 = vector.broadcast %22 : vector<8x1xf32> to vector<8x4xf32>
    %24 = vector.extract_strided_slice %4 {offsets = [16, 0], sizes = [8, 1], strides = [1, 1]} : vector<24x1xf32> to vector<8x1xf32>
    %25 = vector.shape_cast %24 : vector<8x1xf32> to vector<8x1xf32>
    %26 = vector.broadcast %25 : vector<8x1xf32> to vector<8x4xf32>
    %27 = vector.extract_strided_slice %5 {offsets = [16, 0], sizes = [8, 1], strides = [1, 1]} : vector<24x1xf32> to vector<8x1xf32>
    %28 = vector.shape_cast %27 : vector<8x1xf32> to vector<8x1xf32>
    %29 = vector.broadcast %28 : vector<8x1xf32> to vector<8x4xf32>
    %30 = vector.extract_strided_slice %3 {offsets = [0, 0], sizes = [8, 1], strides = [1, 1]} : vector<24x8xf32> to vector<8x1xf32>
    %31 = vector.shape_cast %30 : vector<8x1xf32> to vector<8x1xf32>
    %32 = vector.broadcast %31 : vector<8x1xf32> to vector<8x4xf32>
    %33 = vector.extract_strided_slice %3 {offsets = [0, 1], sizes = [8, 1], strides = [1, 1]} : vector<24x8xf32> to vector<8x1xf32>
    %34 = vector.shape_cast %33 : vector<8x1xf32> to vector<8x1xf32>
    %35 = vector.broadcast %34 : vector<8x1xf32> to vector<8x4xf32>
    %36 = vector.extract_strided_slice %3 {offsets = [0, 2], sizes = [8, 1], strides = [1, 1]} : vector<24x8xf32> to vector<8x1xf32>
    %37 = vector.shape_cast %36 : vector<8x1xf32> to vector<8x1xf32>
    %38 = vector.broadcast %37 : vector<8x1xf32> to vector<8x4xf32>
    %39 = vector.extract_strided_slice %3 {offsets = [0, 3], sizes = [8, 1], strides = [1, 1]} : vector<24x8xf32> to vector<8x1xf32>
    %40 = vector.shape_cast %39 : vector<8x1xf32> to vector<8x1xf32>
    %41 = vector.broadcast %40 : vector<8x1xf32> to vector<8x4xf32>
    %42 = vector.extract_strided_slice %3 {offsets = [0, 4], sizes = [8, 1], strides = [1, 1]} : vector<24x8xf32> to vector<8x1xf32>
    %43 = vector.shape_cast %42 : vector<8x1xf32> to vector<8x1xf32>
    %44 = vector.broadcast %43 : vector<8x1xf32> to vector<8x4xf32>
    %45 = vector.extract_strided_slice %3 {offsets = [0, 5], sizes = [8, 1], strides = [1, 1]} : vector<24x8xf32> to vector<8x1xf32>
    %46 = vector.shape_cast %45 : vector<8x1xf32> to vector<8x1xf32>
    %47 = vector.broadcast %46 : vector<8x1xf32> to vector<8x4xf32>
    %48 = vector.extract_strided_slice %3 {offsets = [0, 6], sizes = [8, 1], strides = [1, 1]} : vector<24x8xf32> to vector<8x1xf32>
    %49 = vector.shape_cast %48 : vector<8x1xf32> to vector<8x1xf32>
    %50 = vector.broadcast %49 : vector<8x1xf32> to vector<8x4xf32>
    %51 = vector.extract_strided_slice %3 {offsets = [0, 7], sizes = [8, 1], strides = [1, 1]} : vector<24x8xf32> to vector<8x1xf32>
    %52 = vector.shape_cast %51 : vector<8x1xf32> to vector<8x1xf32>
    %53 = vector.broadcast %52 : vector<8x1xf32> to vector<8x4xf32>
    %54 = vector.extract_strided_slice %3 {offsets = [8, 0], sizes = [8, 1], strides = [1, 1]} : vector<24x8xf32> to vector<8x1xf32>
    %55 = vector.shape_cast %54 : vector<8x1xf32> to vector<8x1xf32>
    %56 = vector.broadcast %55 : vector<8x1xf32> to vector<8x4xf32>
    %57 = vector.extract_strided_slice %3 {offsets = [8, 1], sizes = [8, 1], strides = [1, 1]} : vector<24x8xf32> to vector<8x1xf32>
    %58 = vector.shape_cast %57 : vector<8x1xf32> to vector<8x1xf32>
    %59 = vector.broadcast %58 : vector<8x1xf32> to vector<8x4xf32>
    %60 = vector.extract_strided_slice %3 {offsets = [8, 2], sizes = [8, 1], strides = [1, 1]} : vector<24x8xf32> to vector<8x1xf32>
    %61 = vector.shape_cast %60 : vector<8x1xf32> to vector<8x1xf32>
    %62 = vector.broadcast %61 : vector<8x1xf32> to vector<8x4xf32>
    %63 = vector.extract_strided_slice %3 {offsets = [8, 3], sizes = [8, 1], strides = [1, 1]} : vector<24x8xf32> to vector<8x1xf32>
    %64 = vector.shape_cast %63 : vector<8x1xf32> to vector<8x1xf32>
    %65 = vector.broadcast %64 : vector<8x1xf32> to vector<8x4xf32>
    %66 = vector.extract_strided_slice %3 {offsets = [8, 4], sizes = [8, 1], strides = [1, 1]} : vector<24x8xf32> to vector<8x1xf32>
    %67 = vector.shape_cast %66 : vector<8x1xf32> to vector<8x1xf32>
    %68 = vector.broadcast %67 : vector<8x1xf32> to vector<8x4xf32>
    %69 = vector.extract_strided_slice %3 {offsets = [8, 5], sizes = [8, 1], strides = [1, 1]} : vector<24x8xf32> to vector<8x1xf32>
    %70 = vector.shape_cast %69 : vector<8x1xf32> to vector<8x1xf32>
    %71 = vector.broadcast %70 : vector<8x1xf32> to vector<8x4xf32>
    %72 = vector.extract_strided_slice %3 {offsets = [8, 6], sizes = [8, 1], strides = [1, 1]} : vector<24x8xf32> to vector<8x1xf32>
    %73 = vector.shape_cast %72 : vector<8x1xf32> to vector<8x1xf32>
    %74 = vector.broadcast %73 : vector<8x1xf32> to vector<8x4xf32>
    %75 = vector.extract_strided_slice %3 {offsets = [8, 7], sizes = [8, 1], strides = [1, 1]} : vector<24x8xf32> to vector<8x1xf32>
    %76 = vector.shape_cast %75 : vector<8x1xf32> to vector<8x1xf32>
    %77 = vector.broadcast %76 : vector<8x1xf32> to vector<8x4xf32>
    %78 = vector.extract_strided_slice %3 {offsets = [16, 0], sizes = [8, 1], strides = [1, 1]} : vector<24x8xf32> to vector<8x1xf32>
    %79 = vector.shape_cast %78 : vector<8x1xf32> to vector<8x1xf32>
    %80 = vector.broadcast %79 : vector<8x1xf32> to vector<8x4xf32>
    %81 = vector.extract_strided_slice %3 {offsets = [16, 1], sizes = [8, 1], strides = [1, 1]} : vector<24x8xf32> to vector<8x1xf32>
    %82 = vector.shape_cast %81 : vector<8x1xf32> to vector<8x1xf32>
    %83 = vector.broadcast %82 : vector<8x1xf32> to vector<8x4xf32>
    %84 = vector.extract_strided_slice %3 {offsets = [16, 2], sizes = [8, 1], strides = [1, 1]} : vector<24x8xf32> to vector<8x1xf32>
    %85 = vector.shape_cast %84 : vector<8x1xf32> to vector<8x1xf32>
    %86 = vector.broadcast %85 : vector<8x1xf32> to vector<8x4xf32>
    %87 = vector.extract_strided_slice %3 {offsets = [16, 3], sizes = [8, 1], strides = [1, 1]} : vector<24x8xf32> to vector<8x1xf32>
    %88 = vector.shape_cast %87 : vector<8x1xf32> to vector<8x1xf32>
    %89 = vector.broadcast %88 : vector<8x1xf32> to vector<8x4xf32>
    %90 = vector.extract_strided_slice %3 {offsets = [16, 4], sizes = [8, 1], strides = [1, 1]} : vector<24x8xf32> to vector<8x1xf32>
    %91 = vector.shape_cast %90 : vector<8x1xf32> to vector<8x1xf32>
    %92 = vector.broadcast %91 : vector<8x1xf32> to vector<8x4xf32>
    %93 = vector.extract_strided_slice %3 {offsets = [16, 5], sizes = [8, 1], strides = [1, 1]} : vector<24x8xf32> to vector<8x1xf32>
    %94 = vector.shape_cast %93 : vector<8x1xf32> to vector<8x1xf32>
    %95 = vector.broadcast %94 : vector<8x1xf32> to vector<8x4xf32>
    %96 = vector.extract_strided_slice %3 {offsets = [16, 6], sizes = [8, 1], strides = [1, 1]} : vector<24x8xf32> to vector<8x1xf32>
    %97 = vector.shape_cast %96 : vector<8x1xf32> to vector<8x1xf32>
    %98 = vector.broadcast %97 : vector<8x1xf32> to vector<8x4xf32>
    %99 = vector.extract_strided_slice %3 {offsets = [16, 7], sizes = [8, 1], strides = [1, 1]} : vector<24x8xf32> to vector<8x1xf32>
    %100 = vector.shape_cast %99 : vector<8x1xf32> to vector<8x1xf32>
    %101 = vector.broadcast %100 : vector<8x1xf32> to vector<8x4xf32>
    %c0_11 = arith.constant 0 : index
    %c0_12 = arith.constant 0 : index
    %102 = vector.load %arg6[%c0_11, %c0_12] : memref<8x1xf32, #tpu.memory_space<vmem>>, vector<8x1xf32>
    %103 = vector.shape_cast %102 : vector<8x1xf32> to vector<8x1xf32>
    %104 = vector.broadcast %103 : vector<8x1xf32> to vector<8x4xf32>
    %105 = vector.extract_strided_slice %0 {offsets = [0, 0], sizes = [1, 4], strides = [1, 1]} : vector<8x4xf32> to vector<1x4xf32>
    %106 = vector.shape_cast %105 : vector<1x4xf32> to vector<1x4xf32>
    %107 = vector.broadcast %106 : vector<1x4xf32> to vector<8x4xf32>
    %108 = arith.mulf %8, %107 : vector<8x4xf32>
    %109 = arith.addf %108, %20 : vector<8x4xf32>
    %110 = arith.mulf %11, %107 : vector<8x4xf32>
    %111 = arith.addf %110, %23 : vector<8x4xf32>
    %112 = arith.mulf %14, %107 : vector<8x4xf32>
    %113 = arith.addf %112, %26 : vector<8x4xf32>
    %114 = vector.extract_strided_slice %1 {offsets = [0, 0], sizes = [1, 4], strides = [1, 1]} : vector<8x4xf32> to vector<1x4xf32>
    %115 = vector.shape_cast %114 : vector<1x4xf32> to vector<1x4xf32>
    %116 = vector.broadcast %115 : vector<1x4xf32> to vector<8x4xf32>
    %117 = vector.extract_strided_slice %1 {offsets = [1, 0], sizes = [1, 4], strides = [1, 1]} : vector<8x4xf32> to vector<1x4xf32>
    %118 = vector.shape_cast %117 : vector<1x4xf32> to vector<1x4xf32>
    %119 = vector.broadcast %118 : vector<1x4xf32> to vector<8x4xf32>
    %120 = vector.extract_strided_slice %1 {offsets = [2, 0], sizes = [1, 4], strides = [1, 1]} : vector<8x4xf32> to vector<1x4xf32>
    %121 = vector.shape_cast %120 : vector<1x4xf32> to vector<1x4xf32>
    %122 = vector.broadcast %121 : vector<1x4xf32> to vector<8x4xf32>
    %123 = vector.extract_strided_slice %1 {offsets = [3, 0], sizes = [1, 4], strides = [1, 1]} : vector<8x4xf32> to vector<1x4xf32>
    %124 = vector.shape_cast %123 : vector<1x4xf32> to vector<1x4xf32>
    %125 = vector.broadcast %124 : vector<1x4xf32> to vector<8x4xf32>
    %126 = vector.extract_strided_slice %1 {offsets = [4, 0], sizes = [1, 4], strides = [1, 1]} : vector<8x4xf32> to vector<1x4xf32>
    %127 = vector.shape_cast %126 : vector<1x4xf32> to vector<1x4xf32>
    %128 = vector.broadcast %127 : vector<1x4xf32> to vector<8x4xf32>
    %129 = vector.extract_strided_slice %1 {offsets = [5, 0], sizes = [1, 4], strides = [1, 1]} : vector<8x4xf32> to vector<1x4xf32>
    %130 = vector.shape_cast %129 : vector<1x4xf32> to vector<1x4xf32>
    %131 = vector.broadcast %130 : vector<1x4xf32> to vector<8x4xf32>
    %132 = vector.extract_strided_slice %1 {offsets = [6, 0], sizes = [1, 4], strides = [1, 1]} : vector<8x4xf32> to vector<1x4xf32>
    %133 = vector.shape_cast %132 : vector<1x4xf32> to vector<1x4xf32>
    %134 = vector.broadcast %133 : vector<1x4xf32> to vector<8x4xf32>
    %135 = vector.extract_strided_slice %1 {offsets = [7, 0], sizes = [1, 4], strides = [1, 1]} : vector<8x4xf32> to vector<1x4xf32>
    %136 = vector.shape_cast %135 : vector<1x4xf32> to vector<1x4xf32>
    %137 = vector.broadcast %136 : vector<1x4xf32> to vector<8x4xf32>
    %138 = arith.mulf %32, %116 : vector<8x4xf32>
    %139 = arith.mulf %56, %116 : vector<8x4xf32>
    %140 = arith.mulf %80, %116 : vector<8x4xf32>
    %141 = arith.addf %29, %140 : vector<8x4xf32>
    %142 = arith.mulf %35, %119 : vector<8x4xf32>
    %143 = arith.addf %138, %142 : vector<8x4xf32>
    %144 = arith.mulf %59, %119 : vector<8x4xf32>
    %145 = arith.addf %139, %144 : vector<8x4xf32>
    %146 = arith.mulf %83, %119 : vector<8x4xf32>
    %147 = arith.addf %141, %146 : vector<8x4xf32>
    %148 = arith.mulf %38, %122 : vector<8x4xf32>
    %149 = arith.addf %143, %148 : vector<8x4xf32>
    %150 = arith.mulf %62, %122 : vector<8x4xf32>
    %151 = arith.addf %145, %150 : vector<8x4xf32>
    %152 = arith.mulf %86, %122 : vector<8x4xf32>
    %153 = arith.addf %147, %152 : vector<8x4xf32>
    %154 = arith.mulf %41, %125 : vector<8x4xf32>
    %155 = arith.addf %149, %154 : vector<8x4xf32>
    %156 = arith.mulf %65, %125 : vector<8x4xf32>
    %157 = arith.addf %151, %156 : vector<8x4xf32>
    %158 = arith.mulf %89, %125 : vector<8x4xf32>
    %159 = arith.addf %153, %158 : vector<8x4xf32>
    %160 = arith.mulf %44, %128 : vector<8x4xf32>
    %161 = arith.addf %155, %160 : vector<8x4xf32>
    %162 = arith.mulf %68, %128 : vector<8x4xf32>
    %163 = arith.addf %157, %162 : vector<8x4xf32>
    %164 = arith.mulf %92, %128 : vector<8x4xf32>
    %165 = arith.addf %159, %164 : vector<8x4xf32>
    %166 = arith.mulf %47, %131 : vector<8x4xf32>
    %167 = arith.addf %161, %166 : vector<8x4xf32>
    %168 = arith.mulf %71, %131 : vector<8x4xf32>
    %169 = arith.addf %163, %168 : vector<8x4xf32>
    %170 = arith.mulf %95, %131 : vector<8x4xf32>
    %171 = arith.addf %165, %170 : vector<8x4xf32>
    %172 = arith.mulf %50, %134 : vector<8x4xf32>
    %173 = arith.addf %167, %172 : vector<8x4xf32>
    %174 = arith.mulf %74, %134 : vector<8x4xf32>
    %175 = arith.addf %169, %174 : vector<8x4xf32>
    %176 = arith.mulf %98, %134 : vector<8x4xf32>
    %177 = arith.addf %171, %176 : vector<8x4xf32>
    %178 = arith.mulf %53, %137 : vector<8x4xf32>
    %179 = arith.addf %173, %178 : vector<8x4xf32>
    %180 = arith.mulf %77, %137 : vector<8x4xf32>
    %181 = arith.addf %175, %180 : vector<8x4xf32>
    %182 = arith.mulf %101, %137 : vector<8x4xf32>
    %183 = arith.addf %177, %182 : vector<8x4xf32>
    %184 = arith.addf %109, %179 : vector<8x4xf32>
    %185 = arith.negf %184 : vector<8x4xf32>
    %186 = math.exp %185 : vector<8x4xf32>
    %cst = arith.constant 1.000000e+00 : f32
    %187 = vector.broadcast %cst : f32 to vector<8x4xf32>
    %188 = arith.addf %187, %186 : vector<8x4xf32>
    %189 = arith.divf %187, %188 : vector<8x4xf32>
    %190 = arith.addf %111, %181 : vector<8x4xf32>
    %191 = arith.negf %190 : vector<8x4xf32>
    %192 = math.exp %191 : vector<8x4xf32>
    %cst_13 = arith.constant 1.000000e+00 : f32
    %193 = vector.broadcast %cst_13 : f32 to vector<8x4xf32>
    %194 = arith.addf %193, %192 : vector<8x4xf32>
    %195 = arith.divf %193, %194 : vector<8x4xf32>
    %196 = arith.mulf %189, %183 : vector<8x4xf32>
    %197 = arith.addf %113, %196 : vector<8x4xf32>
    %198 = math.tanh %197 : vector<8x4xf32>
    %199 = arith.subf %1, %198 : vector<8x4xf32>
    %200 = arith.mulf %195, %199 : vector<8x4xf32>
    %201 = arith.addf %198, %200 : vector<8x4xf32>
    %202 = vector.extract_strided_slice %0 {offsets = [1, 0], sizes = [1, 4], strides = [1, 1]} : vector<8x4xf32> to vector<1x4xf32>
    %203 = vector.shape_cast %202 : vector<1x4xf32> to vector<1x4xf32>
    %204 = vector.broadcast %203 : vector<1x4xf32> to vector<8x4xf32>
    %205 = arith.mulf %8, %204 : vector<8x4xf32>
    %206 = arith.addf %205, %20 : vector<8x4xf32>
    %207 = arith.mulf %11, %204 : vector<8x4xf32>
    %208 = arith.addf %207, %23 : vector<8x4xf32>
    %209 = arith.mulf %14, %204 : vector<8x4xf32>
    %210 = arith.addf %209, %26 : vector<8x4xf32>
    %211 = vector.extract_strided_slice %201 {offsets = [0, 0], sizes = [1, 4], strides = [1, 1]} : vector<8x4xf32> to vector<1x4xf32>
    %212 = vector.shape_cast %211 : vector<1x4xf32> to vector<1x4xf32>
    %213 = vector.broadcast %212 : vector<1x4xf32> to vector<8x4xf32>
    %214 = vector.extract_strided_slice %201 {offsets = [1, 0], sizes = [1, 4], strides = [1, 1]} : vector<8x4xf32> to vector<1x4xf32>
    %215 = vector.shape_cast %214 : vector<1x4xf32> to vector<1x4xf32>
    %216 = vector.broadcast %215 : vector<1x4xf32> to vector<8x4xf32>
    %217 = vector.extract_strided_slice %201 {offsets = [2, 0], sizes = [1, 4], strides = [1, 1]} : vector<8x4xf32> to vector<1x4xf32>
    %218 = vector.shape_cast %217 : vector<1x4xf32> to vector<1x4xf32>
    %219 = vector.broadcast %218 : vector<1x4xf32> to vector<8x4xf32>
    %220 = vector.extract_strided_slice %201 {offsets = [3, 0], sizes = [1, 4], strides = [1, 1]} : vector<8x4xf32> to vector<1x4xf32>
    %221 = vector.shape_cast %220 : vector<1x4xf32> to vector<1x4xf32>
    %222 = vector.broadcast %221 : vector<1x4xf32> to vector<8x4xf32>
    %223 = vector.extract_strided_slice %201 {offsets = [4, 0], sizes = [1, 4], strides = [1, 1]} : vector<8x4xf32> to vector<1x4xf32>
    %224 = vector.shape_cast %223 : vector<1x4xf32> to vector<1x4xf32>
    %225 = vector.broadcast %224 : vector<1x4xf32> to vector<8x4xf32>
    %226 = vector.extract_strided_slice %201 {offsets = [5, 0], sizes = [1, 4], strides = [1, 1]} : vector<8x4xf32> to vector<1x4xf32>
    %227 = vector.shape_cast %226 : vector<1x4xf32> to vector<1x4xf32>
    %228 = vector.broadcast %227 : vector<1x4xf32> to vector<8x4xf32>
    %229 = vector.extract_strided_slice %201 {offsets = [6, 0], sizes = [1, 4], strides = [1, 1]} : vector<8x4xf32> to vector<1x4xf32>
    %230 = vector.shape_cast %229 : vector<1x4xf32> to vector<1x4xf32>
    %231 = vector.broadcast %230 : vector<1x4xf32> to vector<8x4xf32>
    %232 = vector.extract_strided_slice %201 {offsets = [7, 0], sizes = [1, 4], strides = [1, 1]} : vector<8x4xf32> to vector<1x4xf32>
    %233 = vector.shape_cast %232 : vector<1x4xf32> to vector<1x4xf32>
    %234 = vector.broadcast %233 : vector<1x4xf32> to vector<8x4xf32>
    %235 = arith.mulf %32, %213 : vector<8x4xf32>
    %236 = arith.mulf %56, %213 : vector<8x4xf32>
    %237 = arith.mulf %80, %213 : vector<8x4xf32>
    %238 = arith.addf %29, %237 : vector<8x4xf32>
    %239 = arith.mulf %35, %216 : vector<8x4xf32>
    %240 = arith.addf %235, %239 : vector<8x4xf32>
    %241 = arith.mulf %59, %216 : vector<8x4xf32>
    %242 = arith.addf %236, %241 : vector<8x4xf32>
    %243 = arith.mulf %83, %216 : vector<8x4xf32>
    %244 = arith.addf %238, %243 : vector<8x4xf32>
    %245 = arith.mulf %38, %219 : vector<8x4xf32>
    %246 = arith.addf %240, %245 : vector<8x4xf32>
    %247 = arith.mulf %62, %219 : vector<8x4xf32>
    %248 = arith.addf %242, %247 : vector<8x4xf32>
    %249 = arith.mulf %86, %219 : vector<8x4xf32>
    %250 = arith.addf %244, %249 : vector<8x4xf32>
    %251 = arith.mulf %41, %222 : vector<8x4xf32>
    %252 = arith.addf %246, %251 : vector<8x4xf32>
    %253 = arith.mulf %65, %222 : vector<8x4xf32>
    %254 = arith.addf %248, %253 : vector<8x4xf32>
    %255 = arith.mulf %89, %222 : vector<8x4xf32>
    %256 = arith.addf %250, %255 : vector<8x4xf32>
    %257 = arith.mulf %44, %225 : vector<8x4xf32>
    %258 = arith.addf %252, %257 : vector<8x4xf32>
    %259 = arith.mulf %68, %225 : vector<8x4xf32>
    %260 = arith.addf %254, %259 : vector<8x4xf32>
    %261 = arith.mulf %92, %225 : vector<8x4xf32>
    %262 = arith.addf %256, %261 : vector<8x4xf32>
    %263 = arith.mulf %47, %228 : vector<8x4xf32>
    %264 = arith.addf %258, %263 : vector<8x4xf32>
    %265 = arith.mulf %71, %228 : vector<8x4xf32>
    %266 = arith.addf %260, %265 : vector<8x4xf32>
    %267 = arith.mulf %95, %228 : vector<8x4xf32>
    %268 = arith.addf %262, %267 : vector<8x4xf32>
    %269 = arith.mulf %50, %231 : vector<8x4xf32>
    %270 = arith.addf %264, %269 : vector<8x4xf32>
    %271 = arith.mulf %74, %231 : vector<8x4xf32>
    %272 = arith.addf %266, %271 : vector<8x4xf32>
    %273 = arith.mulf %98, %231 : vector<8x4xf32>
    %274 = arith.addf %268, %273 : vector<8x4xf32>
    %275 = arith.mulf %53, %234 : vector<8x4xf32>
    %276 = arith.addf %270, %275 : vector<8x4xf32>
    %277 = arith.mulf %77, %234 : vector<8x4xf32>
    %278 = arith.addf %272, %277 : vector<8x4xf32>
    %279 = arith.mulf %101, %234 : vector<8x4xf32>
    %280 = arith.addf %274, %279 : vector<8x4xf32>
    %281 = arith.addf %206, %276 : vector<8x4xf32>
    %282 = arith.negf %281 : vector<8x4xf32>
    %283 = math.exp %282 : vector<8x4xf32>
    %cst_14 = arith.constant 1.000000e+00 : f32
    %284 = vector.broadcast %cst_14 : f32 to vector<8x4xf32>
    %285 = arith.addf %284, %283 : vector<8x4xf32>
    %286 = arith.divf %284, %285 : vector<8x4xf32>
    %287 = arith.addf %208, %278 : vector<8x4xf32>
    %288 = arith.negf %287 : vector<8x4xf32>
    %289 = math.exp %288 : vector<8x4xf32>
    %cst_15 = arith.constant 1.000000e+00 : f32
    %290 = vector.broadcast %cst_15 : f32 to vector<8x4xf32>
    %291 = arith.addf %290, %289 : vector<8x4xf32>
    %292 = arith.divf %290, %291 : vector<8x4xf32>
    %293 = arith.mulf %286, %280 : vector<8x4xf32>
    %294 = arith.addf %210, %293 : vector<8x4xf32>
    %295 = math.tanh %294 : vector<8x4xf32>
    %296 = arith.subf %201, %295 : vector<8x4xf32>
    %297 = arith.mulf %292, %296 : vector<8x4xf32>
    %298 = arith.addf %295, %297 : vector<8x4xf32>
    %299 = vector.extract_strided_slice %0 {offsets = [2, 0], sizes = [1, 4], strides = [1, 1]} : vector<8x4xf32> to vector<1x4xf32>
    %300 = vector.shape_cast %299 : vector<1x4xf32> to vector<1x4xf32>
    %301 = vector.broadcast %300 : vector<1x4xf32> to vector<8x4xf32>
    %302 = arith.mulf %8, %301 : vector<8x4xf32>
    %303 = arith.addf %302, %20 : vector<8x4xf32>
    %304 = arith.mulf %11, %301 : vector<8x4xf32>
    %305 = arith.addf %304, %23 : vector<8x4xf32>
    %306 = arith.mulf %14, %301 : vector<8x4xf32>
    %307 = arith.addf %306, %26 : vector<8x4xf32>
    %308 = vector.extract_strided_slice %298 {offsets = [0, 0], sizes = [1, 4], strides = [1, 1]} : vector<8x4xf32> to vector<1x4xf32>
    %309 = vector.shape_cast %308 : vector<1x4xf32> to vector<1x4xf32>
    %310 = vector.broadcast %309 : vector<1x4xf32> to vector<8x4xf32>
    %311 = vector.extract_strided_slice %298 {offsets = [1, 0], sizes = [1, 4], strides = [1, 1]} : vector<8x4xf32> to vector<1x4xf32>
    %312 = vector.shape_cast %311 : vector<1x4xf32> to vector<1x4xf32>
    %313 = vector.broadcast %312 : vector<1x4xf32> to vector<8x4xf32>
    %314 = vector.extract_strided_slice %298 {offsets = [2, 0], sizes = [1, 4], strides = [1, 1]} : vector<8x4xf32> to vector<1x4xf32>
    %315 = vector.shape_cast %314 : vector<1x4xf32> to vector<1x4xf32>
    %316 = vector.broadcast %315 : vector<1x4xf32> to vector<8x4xf32>
    %317 = vector.extract_strided_slice %298 {offsets = [3, 0], sizes = [1, 4], strides = [1, 1]} : vector<8x4xf32> to vector<1x4xf32>
    %318 = vector.shape_cast %317 : vector<1x4xf32> to vector<1x4xf32>
    %319 = vector.broadcast %318 : vector<1x4xf32> to vector<8x4xf32>
    %320 = vector.extract_strided_slice %298 {offsets = [4, 0], sizes = [1, 4], strides = [1, 1]} : vector<8x4xf32> to vector<1x4xf32>
    %321 = vector.shape_cast %320 : vector<1x4xf32> to vector<1x4xf32>
    %322 = vector.broadcast %321 : vector<1x4xf32> to vector<8x4xf32>
    %323 = vector.extract_strided_slice %298 {offsets = [5, 0], sizes = [1, 4], strides = [1, 1]} : vector<8x4xf32> to vector<1x4xf32>
    %324 = vector.shape_cast %323 : vector<1x4xf32> to vector<1x4xf32>
    %325 = vector.broadcast %324 : vector<1x4xf32> to vector<8x4xf32>
    %326 = vector.extract_strided_slice %298 {offsets = [6, 0], sizes = [1, 4], strides = [1, 1]} : vector<8x4xf32> to vector<1x4xf32>
    %327 = vector.shape_cast %326 : vector<1x4xf32> to vector<1x4xf32>
    %328 = vector.broadcast %327 : vector<1x4xf32> to vector<8x4xf32>
    %329 = vector.extract_strided_slice %298 {offsets = [7, 0], sizes = [1, 4], strides = [1, 1]} : vector<8x4xf32> to vector<1x4xf32>
    %330 = vector.shape_cast %329 : vector<1x4xf32> to vector<1x4xf32>
    %331 = vector.broadcast %330 : vector<1x4xf32> to vector<8x4xf32>
    %332 = arith.mulf %32, %310 : vector<8x4xf32>
    %333 = arith.mulf %56, %310 : vector<8x4xf32>
    %334 = arith.mulf %80, %310 : vector<8x4xf32>
    %335 = arith.addf %29, %334 : vector<8x4xf32>
    %336 = arith.mulf %35, %313 : vector<8x4xf32>
    %337 = arith.addf %332, %336 : vector<8x4xf32>
    %338 = arith.mulf %59, %313 : vector<8x4xf32>
    %339 = arith.addf %333, %338 : vector<8x4xf32>
    %340 = arith.mulf %83, %313 : vector<8x4xf32>
    %341 = arith.addf %335, %340 : vector<8x4xf32>
    %342 = arith.mulf %38, %316 : vector<8x4xf32>
    %343 = arith.addf %337, %342 : vector<8x4xf32>
    %344 = arith.mulf %62, %316 : vector<8x4xf32>
    %345 = arith.addf %339, %344 : vector<8x4xf32>
    %346 = arith.mulf %86, %316 : vector<8x4xf32>
    %347 = arith.addf %341, %346 : vector<8x4xf32>
    %348 = arith.mulf %41, %319 : vector<8x4xf32>
    %349 = arith.addf %343, %348 : vector<8x4xf32>
    %350 = arith.mulf %65, %319 : vector<8x4xf32>
    %351 = arith.addf %345, %350 : vector<8x4xf32>
    %352 = arith.mulf %89, %319 : vector<8x4xf32>
    %353 = arith.addf %347, %352 : vector<8x4xf32>
    %354 = arith.mulf %44, %322 : vector<8x4xf32>
    %355 = arith.addf %349, %354 : vector<8x4xf32>
    %356 = arith.mulf %68, %322 : vector<8x4xf32>
    %357 = arith.addf %351, %356 : vector<8x4xf32>
    %358 = arith.mulf %92, %322 : vector<8x4xf32>
    %359 = arith.addf %353, %358 : vector<8x4xf32>
    %360 = arith.mulf %47, %325 : vector<8x4xf32>
    %361 = arith.addf %355, %360 : vector<8x4xf32>
    %362 = arith.mulf %71, %325 : vector<8x4xf32>
    %363 = arith.addf %357, %362 : vector<8x4xf32>
    %364 = arith.mulf %95, %325 : vector<8x4xf32>
    %365 = arith.addf %359, %364 : vector<8x4xf32>
    %366 = arith.mulf %50, %328 : vector<8x4xf32>
    %367 = arith.addf %361, %366 : vector<8x4xf32>
    %368 = arith.mulf %74, %328 : vector<8x4xf32>
    %369 = arith.addf %363, %368 : vector<8x4xf32>
    %370 = arith.mulf %98, %328 : vector<8x4xf32>
    %371 = arith.addf %365, %370 : vector<8x4xf32>
    %372 = arith.mulf %53, %331 : vector<8x4xf32>
    %373 = arith.addf %367, %372 : vector<8x4xf32>
    %374 = arith.mulf %77, %331 : vector<8x4xf32>
    %375 = arith.addf %369, %374 : vector<8x4xf32>
    %376 = arith.mulf %101, %331 : vector<8x4xf32>
    %377 = arith.addf %371, %376 : vector<8x4xf32>
    %378 = arith.addf %303, %373 : vector<8x4xf32>
    %379 = arith.negf %378 : vector<8x4xf32>
    %380 = math.exp %379 : vector<8x4xf32>
    %cst_16 = arith.constant 1.000000e+00 : f32
    %381 = vector.broadcast %cst_16 : f32 to vector<8x4xf32>
    %382 = arith.addf %381, %380 : vector<8x4xf32>
    %383 = arith.divf %381, %382 : vector<8x4xf32>
    %384 = arith.addf %305, %375 : vector<8x4xf32>
    %385 = arith.negf %384 : vector<8x4xf32>
    %386 = math.exp %385 : vector<8x4xf32>
    %cst_17 = arith.constant 1.000000e+00 : f32
    %387 = vector.broadcast %cst_17 : f32 to vector<8x4xf32>
    %388 = arith.addf %387, %386 : vector<8x4xf32>
    %389 = arith.divf %387, %388 : vector<8x4xf32>
    %390 = arith.mulf %383, %377 : vector<8x4xf32>
    %391 = arith.addf %307, %390 : vector<8x4xf32>
    %392 = math.tanh %391 : vector<8x4xf32>
    %393 = arith.subf %298, %392 : vector<8x4xf32>
    %394 = arith.mulf %389, %393 : vector<8x4xf32>
    %395 = arith.addf %392, %394 : vector<8x4xf32>
    %396 = vector.extract_strided_slice %0 {offsets = [3, 0], sizes = [1, 4], strides = [1, 1]} : vector<8x4xf32> to vector<1x4xf32>
    %397 = vector.shape_cast %396 : vector<1x4xf32> to vector<1x4xf32>
    %398 = vector.broadcast %397 : vector<1x4xf32> to vector<8x4xf32>
    %399 = arith.mulf %8, %398 : vector<8x4xf32>
    %400 = arith.addf %399, %20 : vector<8x4xf32>
    %401 = arith.mulf %11, %398 : vector<8x4xf32>
    %402 = arith.addf %401, %23 : vector<8x4xf32>
    %403 = arith.mulf %14, %398 : vector<8x4xf32>
    %404 = arith.addf %403, %26 : vector<8x4xf32>
    %405 = vector.extract_strided_slice %395 {offsets = [0, 0], sizes = [1, 4], strides = [1, 1]} : vector<8x4xf32> to vector<1x4xf32>
    %406 = vector.shape_cast %405 : vector<1x4xf32> to vector<1x4xf32>
    %407 = vector.broadcast %406 : vector<1x4xf32> to vector<8x4xf32>
    %408 = vector.extract_strided_slice %395 {offsets = [1, 0], sizes = [1, 4], strides = [1, 1]} : vector<8x4xf32> to vector<1x4xf32>
    %409 = vector.shape_cast %408 : vector<1x4xf32> to vector<1x4xf32>
    %410 = vector.broadcast %409 : vector<1x4xf32> to vector<8x4xf32>
    %411 = vector.extract_strided_slice %395 {offsets = [2, 0], sizes = [1, 4], strides = [1, 1]} : vector<8x4xf32> to vector<1x4xf32>
    %412 = vector.shape_cast %411 : vector<1x4xf32> to vector<1x4xf32>
    %413 = vector.broadcast %412 : vector<1x4xf32> to vector<8x4xf32>
    %414 = vector.extract_strided_slice %395 {offsets = [3, 0], sizes = [1, 4], strides = [1, 1]} : vector<8x4xf32> to vector<1x4xf32>
    %415 = vector.shape_cast %414 : vector<1x4xf32> to vector<1x4xf32>
    %416 = vector.broadcast %415 : vector<1x4xf32> to vector<8x4xf32>
    %417 = vector.extract_strided_slice %395 {offsets = [4, 0], sizes = [1, 4], strides = [1, 1]} : vector<8x4xf32> to vector<1x4xf32>
    %418 = vector.shape_cast %417 : vector<1x4xf32> to vector<1x4xf32>
    %419 = vector.broadcast %418 : vector<1x4xf32> to vector<8x4xf32>
    %420 = vector.extract_strided_slice %395 {offsets = [5, 0], sizes = [1, 4], strides = [1, 1]} : vector<8x4xf32> to vector<1x4xf32>
    %421 = vector.shape_cast %420 : vector<1x4xf32> to vector<1x4xf32>
    %422 = vector.broadcast %421 : vector<1x4xf32> to vector<8x4xf32>
    %423 = vector.extract_strided_slice %395 {offsets = [6, 0], sizes = [1, 4], strides = [1, 1]} : vector<8x4xf32> to vector<1x4xf32>
    %424 = vector.shape_cast %423 : vector<1x4xf32> to vector<1x4xf32>
    %425 = vector.broadcast %424 : vector<1x4xf32> to vector<8x4xf32>
    %426 = vector.extract_strided_slice %395 {offsets = [7, 0], sizes = [1, 4], strides = [1, 1]} : vector<8x4xf32> to vector<1x4xf32>
    %427 = vector.shape_cast %426 : vector<1x4xf32> to vector<1x4xf32>
    %428 = vector.broadcast %427 : vector<1x4xf32> to vector<8x4xf32>
    %429 = arith.mulf %32, %407 : vector<8x4xf32>
    %430 = arith.mulf %56, %407 : vector<8x4xf32>
    %431 = arith.mulf %80, %407 : vector<8x4xf32>
    %432 = arith.addf %29, %431 : vector<8x4xf32>
    %433 = arith.mulf %35, %410 : vector<8x4xf32>
    %434 = arith.addf %429, %433 : vector<8x4xf32>
    %435 = arith.mulf %59, %410 : vector<8x4xf32>
    %436 = arith.addf %430, %435 : vector<8x4xf32>
    %437 = arith.mulf %83, %410 : vector<8x4xf32>
    %438 = arith.addf %432, %437 : vector<8x4xf32>
    %439 = arith.mulf %38, %413 : vector<8x4xf32>
    %440 = arith.addf %434, %439 : vector<8x4xf32>
    %441 = arith.mulf %62, %413 : vector<8x4xf32>
    %442 = arith.addf %436, %441 : vector<8x4xf32>
    %443 = arith.mulf %86, %413 : vector<8x4xf32>
    %444 = arith.addf %438, %443 : vector<8x4xf32>
    %445 = arith.mulf %41, %416 : vector<8x4xf32>
    %446 = arith.addf %440, %445 : vector<8x4xf32>
    %447 = arith.mulf %65, %416 : vector<8x4xf32>
    %448 = arith.addf %442, %447 : vector<8x4xf32>
    %449 = arith.mulf %89, %416 : vector<8x4xf32>
    %450 = arith.addf %444, %449 : vector<8x4xf32>
    %451 = arith.mulf %44, %419 : vector<8x4xf32>
    %452 = arith.addf %446, %451 : vector<8x4xf32>
    %453 = arith.mulf %68, %419 : vector<8x4xf32>
    %454 = arith.addf %448, %453 : vector<8x4xf32>
    %455 = arith.mulf %92, %419 : vector<8x4xf32>
    %456 = arith.addf %450, %455 : vector<8x4xf32>
    %457 = arith.mulf %47, %422 : vector<8x4xf32>
    %458 = arith.addf %452, %457 : vector<8x4xf32>
    %459 = arith.mulf %71, %422 : vector<8x4xf32>
    %460 = arith.addf %454, %459 : vector<8x4xf32>
    %461 = arith.mulf %95, %422 : vector<8x4xf32>
    %462 = arith.addf %456, %461 : vector<8x4xf32>
    %463 = arith.mulf %50, %425 : vector<8x4xf32>
    %464 = arith.addf %458, %463 : vector<8x4xf32>
    %465 = arith.mulf %74, %425 : vector<8x4xf32>
    %466 = arith.addf %460, %465 : vector<8x4xf32>
    %467 = arith.mulf %98, %425 : vector<8x4xf32>
    %468 = arith.addf %462, %467 : vector<8x4xf32>
    %469 = arith.mulf %53, %428 : vector<8x4xf32>
    %470 = arith.addf %464, %469 : vector<8x4xf32>
    %471 = arith.mulf %77, %428 : vector<8x4xf32>
    %472 = arith.addf %466, %471 : vector<8x4xf32>
    %473 = arith.mulf %101, %428 : vector<8x4xf32>
    %474 = arith.addf %468, %473 : vector<8x4xf32>
    %475 = arith.addf %400, %470 : vector<8x4xf32>
    %476 = arith.negf %475 : vector<8x4xf32>
    %477 = math.exp %476 : vector<8x4xf32>
    %cst_18 = arith.constant 1.000000e+00 : f32
    %478 = vector.broadcast %cst_18 : f32 to vector<8x4xf32>
    %479 = arith.addf %478, %477 : vector<8x4xf32>
    %480 = arith.divf %478, %479 : vector<8x4xf32>
    %481 = arith.addf %402, %472 : vector<8x4xf32>
    %482 = arith.negf %481 : vector<8x4xf32>
    %483 = math.exp %482 : vector<8x4xf32>
    %cst_19 = arith.constant 1.000000e+00 : f32
    %484 = vector.broadcast %cst_19 : f32 to vector<8x4xf32>
    %485 = arith.addf %484, %483 : vector<8x4xf32>
    %486 = arith.divf %484, %485 : vector<8x4xf32>
    %487 = arith.mulf %480, %474 : vector<8x4xf32>
    %488 = arith.addf %404, %487 : vector<8x4xf32>
    %489 = math.tanh %488 : vector<8x4xf32>
    %490 = arith.subf %395, %489 : vector<8x4xf32>
    %491 = arith.mulf %486, %490 : vector<8x4xf32>
    %492 = arith.addf %489, %491 : vector<8x4xf32>
    %493 = vector.extract_strided_slice %0 {offsets = [4, 0], sizes = [1, 4], strides = [1, 1]} : vector<8x4xf32> to vector<1x4xf32>
    %494 = vector.shape_cast %493 : vector<1x4xf32> to vector<1x4xf32>
    %495 = vector.broadcast %494 : vector<1x4xf32> to vector<8x4xf32>
    %496 = arith.mulf %8, %495 : vector<8x4xf32>
    %497 = arith.addf %496, %20 : vector<8x4xf32>
    %498 = arith.mulf %11, %495 : vector<8x4xf32>
    %499 = arith.addf %498, %23 : vector<8x4xf32>
    %500 = arith.mulf %14, %495 : vector<8x4xf32>
    %501 = arith.addf %500, %26 : vector<8x4xf32>
    %502 = vector.extract_strided_slice %492 {offsets = [0, 0], sizes = [1, 4], strides = [1, 1]} : vector<8x4xf32> to vector<1x4xf32>
    %503 = vector.shape_cast %502 : vector<1x4xf32> to vector<1x4xf32>
    %504 = vector.broadcast %503 : vector<1x4xf32> to vector<8x4xf32>
    %505 = vector.extract_strided_slice %492 {offsets = [1, 0], sizes = [1, 4], strides = [1, 1]} : vector<8x4xf32> to vector<1x4xf32>
    %506 = vector.shape_cast %505 : vector<1x4xf32> to vector<1x4xf32>
    %507 = vector.broadcast %506 : vector<1x4xf32> to vector<8x4xf32>
    %508 = vector.extract_strided_slice %492 {offsets = [2, 0], sizes = [1, 4], strides = [1, 1]} : vector<8x4xf32> to vector<1x4xf32>
    %509 = vector.shape_cast %508 : vector<1x4xf32> to vector<1x4xf32>
    %510 = vector.broadcast %509 : vector<1x4xf32> to vector<8x4xf32>
    %511 = vector.extract_strided_slice %492 {offsets = [3, 0], sizes = [1, 4], strides = [1, 1]} : vector<8x4xf32> to vector<1x4xf32>
    %512 = vector.shape_cast %511 : vector<1x4xf32> to vector<1x4xf32>
    %513 = vector.broadcast %512 : vector<1x4xf32> to vector<8x4xf32>
    %514 = vector.extract_strided_slice %492 {offsets = [4, 0], sizes = [1, 4], strides = [1, 1]} : vector<8x4xf32> to vector<1x4xf32>
    %515 = vector.shape_cast %514 : vector<1x4xf32> to vector<1x4xf32>
    %516 = vector.broadcast %515 : vector<1x4xf32> to vector<8x4xf32>
    %517 = vector.extract_strided_slice %492 {offsets = [5, 0], sizes = [1, 4], strides = [1, 1]} : vector<8x4xf32> to vector<1x4xf32>
    %518 = vector.shape_cast %517 : vector<1x4xf32> to vector<1x4xf32>
    %519 = vector.broadcast %518 : vector<1x4xf32> to vector<8x4xf32>
    %520 = vector.extract_strided_slice %492 {offsets = [6, 0], sizes = [1, 4], strides = [1, 1]} : vector<8x4xf32> to vector<1x4xf32>
    %521 = vector.shape_cast %520 : vector<1x4xf32> to vector<1x4xf32>
    %522 = vector.broadcast %521 : vector<1x4xf32> to vector<8x4xf32>
    %523 = vector.extract_strided_slice %492 {offsets = [7, 0], sizes = [1, 4], strides = [1, 1]} : vector<8x4xf32> to vector<1x4xf32>
    %524 = vector.shape_cast %523 : vector<1x4xf32> to vector<1x4xf32>
    %525 = vector.broadcast %524 : vector<1x4xf32> to vector<8x4xf32>
    %526 = arith.mulf %32, %504 : vector<8x4xf32>
    %527 = arith.mulf %56, %504 : vector<8x4xf32>
    %528 = arith.mulf %80, %504 : vector<8x4xf32>
    %529 = arith.addf %29, %528 : vector<8x4xf32>
    %530 = arith.mulf %35, %507 : vector<8x4xf32>
    %531 = arith.addf %526, %530 : vector<8x4xf32>
    %532 = arith.mulf %59, %507 : vector<8x4xf32>
    %533 = arith.addf %527, %532 : vector<8x4xf32>
    %534 = arith.mulf %83, %507 : vector<8x4xf32>
    %535 = arith.addf %529, %534 : vector<8x4xf32>
    %536 = arith.mulf %38, %510 : vector<8x4xf32>
    %537 = arith.addf %531, %536 : vector<8x4xf32>
    %538 = arith.mulf %62, %510 : vector<8x4xf32>
    %539 = arith.addf %533, %538 : vector<8x4xf32>
    %540 = arith.mulf %86, %510 : vector<8x4xf32>
    %541 = arith.addf %535, %540 : vector<8x4xf32>
    %542 = arith.mulf %41, %513 : vector<8x4xf32>
    %543 = arith.addf %537, %542 : vector<8x4xf32>
    %544 = arith.mulf %65, %513 : vector<8x4xf32>
    %545 = arith.addf %539, %544 : vector<8x4xf32>
    %546 = arith.mulf %89, %513 : vector<8x4xf32>
    %547 = arith.addf %541, %546 : vector<8x4xf32>
    %548 = arith.mulf %44, %516 : vector<8x4xf32>
    %549 = arith.addf %543, %548 : vector<8x4xf32>
    %550 = arith.mulf %68, %516 : vector<8x4xf32>
    %551 = arith.addf %545, %550 : vector<8x4xf32>
    %552 = arith.mulf %92, %516 : vector<8x4xf32>
    %553 = arith.addf %547, %552 : vector<8x4xf32>
    %554 = arith.mulf %47, %519 : vector<8x4xf32>
    %555 = arith.addf %549, %554 : vector<8x4xf32>
    %556 = arith.mulf %71, %519 : vector<8x4xf32>
    %557 = arith.addf %551, %556 : vector<8x4xf32>
    %558 = arith.mulf %95, %519 : vector<8x4xf32>
    %559 = arith.addf %553, %558 : vector<8x4xf32>
    %560 = arith.mulf %50, %522 : vector<8x4xf32>
    %561 = arith.addf %555, %560 : vector<8x4xf32>
    %562 = arith.mulf %74, %522 : vector<8x4xf32>
    %563 = arith.addf %557, %562 : vector<8x4xf32>
    %564 = arith.mulf %98, %522 : vector<8x4xf32>
    %565 = arith.addf %559, %564 : vector<8x4xf32>
    %566 = arith.mulf %53, %525 : vector<8x4xf32>
    %567 = arith.addf %561, %566 : vector<8x4xf32>
    %568 = arith.mulf %77, %525 : vector<8x4xf32>
    %569 = arith.addf %563, %568 : vector<8x4xf32>
    %570 = arith.mulf %101, %525 : vector<8x4xf32>
    %571 = arith.addf %565, %570 : vector<8x4xf32>
    %572 = arith.addf %497, %567 : vector<8x4xf32>
    %573 = arith.negf %572 : vector<8x4xf32>
    %574 = math.exp %573 : vector<8x4xf32>
    %cst_20 = arith.constant 1.000000e+00 : f32
    %575 = vector.broadcast %cst_20 : f32 to vector<8x4xf32>
    %576 = arith.addf %575, %574 : vector<8x4xf32>
    %577 = arith.divf %575, %576 : vector<8x4xf32>
    %578 = arith.addf %499, %569 : vector<8x4xf32>
    %579 = arith.negf %578 : vector<8x4xf32>
    %580 = math.exp %579 : vector<8x4xf32>
    %cst_21 = arith.constant 1.000000e+00 : f32
    %581 = vector.broadcast %cst_21 : f32 to vector<8x4xf32>
    %582 = arith.addf %581, %580 : vector<8x4xf32>
    %583 = arith.divf %581, %582 : vector<8x4xf32>
    %584 = arith.mulf %577, %571 : vector<8x4xf32>
    %585 = arith.addf %501, %584 : vector<8x4xf32>
    %586 = math.tanh %585 : vector<8x4xf32>
    %587 = arith.subf %492, %586 : vector<8x4xf32>
    %588 = arith.mulf %583, %587 : vector<8x4xf32>
    %589 = arith.addf %586, %588 : vector<8x4xf32>
    %590 = vector.extract_strided_slice %0 {offsets = [5, 0], sizes = [1, 4], strides = [1, 1]} : vector<8x4xf32> to vector<1x4xf32>
    %591 = vector.shape_cast %590 : vector<1x4xf32> to vector<1x4xf32>
    %592 = vector.broadcast %591 : vector<1x4xf32> to vector<8x4xf32>
    %593 = arith.mulf %8, %592 : vector<8x4xf32>
    %594 = arith.addf %593, %20 : vector<8x4xf32>
    %595 = arith.mulf %11, %592 : vector<8x4xf32>
    %596 = arith.addf %595, %23 : vector<8x4xf32>
    %597 = arith.mulf %14, %592 : vector<8x4xf32>
    %598 = arith.addf %597, %26 : vector<8x4xf32>
    %599 = vector.extract_strided_slice %589 {offsets = [0, 0], sizes = [1, 4], strides = [1, 1]} : vector<8x4xf32> to vector<1x4xf32>
    %600 = vector.shape_cast %599 : vector<1x4xf32> to vector<1x4xf32>
    %601 = vector.broadcast %600 : vector<1x4xf32> to vector<8x4xf32>
    %602 = vector.extract_strided_slice %589 {offsets = [1, 0], sizes = [1, 4], strides = [1, 1]} : vector<8x4xf32> to vector<1x4xf32>
    %603 = vector.shape_cast %602 : vector<1x4xf32> to vector<1x4xf32>
    %604 = vector.broadcast %603 : vector<1x4xf32> to vector<8x4xf32>
    %605 = vector.extract_strided_slice %589 {offsets = [2, 0], sizes = [1, 4], strides = [1, 1]} : vector<8x4xf32> to vector<1x4xf32>
    %606 = vector.shape_cast %605 : vector<1x4xf32> to vector<1x4xf32>
    %607 = vector.broadcast %606 : vector<1x4xf32> to vector<8x4xf32>
    %608 = vector.extract_strided_slice %589 {offsets = [3, 0], sizes = [1, 4], strides = [1, 1]} : vector<8x4xf32> to vector<1x4xf32>
    %609 = vector.shape_cast %608 : vector<1x4xf32> to vector<1x4xf32>
    %610 = vector.broadcast %609 : vector<1x4xf32> to vector<8x4xf32>
    %611 = vector.extract_strided_slice %589 {offsets = [4, 0], sizes = [1, 4], strides = [1, 1]} : vector<8x4xf32> to vector<1x4xf32>
    %612 = vector.shape_cast %611 : vector<1x4xf32> to vector<1x4xf32>
    %613 = vector.broadcast %612 : vector<1x4xf32> to vector<8x4xf32>
    %614 = vector.extract_strided_slice %589 {offsets = [5, 0], sizes = [1, 4], strides = [1, 1]} : vector<8x4xf32> to vector<1x4xf32>
    %615 = vector.shape_cast %614 : vector<1x4xf32> to vector<1x4xf32>
    %616 = vector.broadcast %615 : vector<1x4xf32> to vector<8x4xf32>
    %617 = vector.extract_strided_slice %589 {offsets = [6, 0], sizes = [1, 4], strides = [1, 1]} : vector<8x4xf32> to vector<1x4xf32>
    %618 = vector.shape_cast %617 : vector<1x4xf32> to vector<1x4xf32>
    %619 = vector.broadcast %618 : vector<1x4xf32> to vector<8x4xf32>
    %620 = vector.extract_strided_slice %589 {offsets = [7, 0], sizes = [1, 4], strides = [1, 1]} : vector<8x4xf32> to vector<1x4xf32>
    %621 = vector.shape_cast %620 : vector<1x4xf32> to vector<1x4xf32>
    %622 = vector.broadcast %621 : vector<1x4xf32> to vector<8x4xf32>
    %623 = arith.mulf %32, %601 : vector<8x4xf32>
    %624 = arith.mulf %56, %601 : vector<8x4xf32>
    %625 = arith.mulf %80, %601 : vector<8x4xf32>
    %626 = arith.addf %29, %625 : vector<8x4xf32>
    %627 = arith.mulf %35, %604 : vector<8x4xf32>
    %628 = arith.addf %623, %627 : vector<8x4xf32>
    %629 = arith.mulf %59, %604 : vector<8x4xf32>
    %630 = arith.addf %624, %629 : vector<8x4xf32>
    %631 = arith.mulf %83, %604 : vector<8x4xf32>
    %632 = arith.addf %626, %631 : vector<8x4xf32>
    %633 = arith.mulf %38, %607 : vector<8x4xf32>
    %634 = arith.addf %628, %633 : vector<8x4xf32>
    %635 = arith.mulf %62, %607 : vector<8x4xf32>
    %636 = arith.addf %630, %635 : vector<8x4xf32>
    %637 = arith.mulf %86, %607 : vector<8x4xf32>
    %638 = arith.addf %632, %637 : vector<8x4xf32>
    %639 = arith.mulf %41, %610 : vector<8x4xf32>
    %640 = arith.addf %634, %639 : vector<8x4xf32>
    %641 = arith.mulf %65, %610 : vector<8x4xf32>
    %642 = arith.addf %636, %641 : vector<8x4xf32>
    %643 = arith.mulf %89, %610 : vector<8x4xf32>
    %644 = arith.addf %638, %643 : vector<8x4xf32>
    %645 = arith.mulf %44, %613 : vector<8x4xf32>
    %646 = arith.addf %640, %645 : vector<8x4xf32>
    %647 = arith.mulf %68, %613 : vector<8x4xf32>
    %648 = arith.addf %642, %647 : vector<8x4xf32>
    %649 = arith.mulf %92, %613 : vector<8x4xf32>
    %650 = arith.addf %644, %649 : vector<8x4xf32>
    %651 = arith.mulf %47, %616 : vector<8x4xf32>
    %652 = arith.addf %646, %651 : vector<8x4xf32>
    %653 = arith.mulf %71, %616 : vector<8x4xf32>
    %654 = arith.addf %648, %653 : vector<8x4xf32>
    %655 = arith.mulf %95, %616 : vector<8x4xf32>
    %656 = arith.addf %650, %655 : vector<8x4xf32>
    %657 = arith.mulf %50, %619 : vector<8x4xf32>
    %658 = arith.addf %652, %657 : vector<8x4xf32>
    %659 = arith.mulf %74, %619 : vector<8x4xf32>
    %660 = arith.addf %654, %659 : vector<8x4xf32>
    %661 = arith.mulf %98, %619 : vector<8x4xf32>
    %662 = arith.addf %656, %661 : vector<8x4xf32>
    %663 = arith.mulf %53, %622 : vector<8x4xf32>
    %664 = arith.addf %658, %663 : vector<8x4xf32>
    %665 = arith.mulf %77, %622 : vector<8x4xf32>
    %666 = arith.addf %660, %665 : vector<8x4xf32>
    %667 = arith.mulf %101, %622 : vector<8x4xf32>
    %668 = arith.addf %662, %667 : vector<8x4xf32>
    %669 = arith.addf %594, %664 : vector<8x4xf32>
    %670 = arith.negf %669 : vector<8x4xf32>
    %671 = math.exp %670 : vector<8x4xf32>
    %cst_22 = arith.constant 1.000000e+00 : f32
    %672 = vector.broadcast %cst_22 : f32 to vector<8x4xf32>
    %673 = arith.addf %672, %671 : vector<8x4xf32>
    %674 = arith.divf %672, %673 : vector<8x4xf32>
    %675 = arith.addf %596, %666 : vector<8x4xf32>
    %676 = arith.negf %675 : vector<8x4xf32>
    %677 = math.exp %676 : vector<8x4xf32>
    %cst_23 = arith.constant 1.000000e+00 : f32
    %678 = vector.broadcast %cst_23 : f32 to vector<8x4xf32>
    %679 = arith.addf %678, %677 : vector<8x4xf32>
    %680 = arith.divf %678, %679 : vector<8x4xf32>
    %681 = arith.mulf %674, %668 : vector<8x4xf32>
    %682 = arith.addf %598, %681 : vector<8x4xf32>
    %683 = math.tanh %682 : vector<8x4xf32>
    %684 = arith.subf %589, %683 : vector<8x4xf32>
    %685 = arith.mulf %680, %684 : vector<8x4xf32>
    %686 = arith.addf %683, %685 : vector<8x4xf32>
    %687 = vector.extract_strided_slice %0 {offsets = [6, 0], sizes = [1, 4], strides = [1, 1]} : vector<8x4xf32> to vector<1x4xf32>
    %688 = vector.shape_cast %687 : vector<1x4xf32> to vector<1x4xf32>
    %689 = vector.broadcast %688 : vector<1x4xf32> to vector<8x4xf32>
    %690 = arith.mulf %8, %689 : vector<8x4xf32>
    %691 = arith.addf %690, %20 : vector<8x4xf32>
    %692 = arith.mulf %11, %689 : vector<8x4xf32>
    %693 = arith.addf %692, %23 : vector<8x4xf32>
    %694 = arith.mulf %14, %689 : vector<8x4xf32>
    %695 = arith.addf %694, %26 : vector<8x4xf32>
    %696 = vector.extract_strided_slice %686 {offsets = [0, 0], sizes = [1, 4], strides = [1, 1]} : vector<8x4xf32> to vector<1x4xf32>
    %697 = vector.shape_cast %696 : vector<1x4xf32> to vector<1x4xf32>
    %698 = vector.broadcast %697 : vector<1x4xf32> to vector<8x4xf32>
    %699 = vector.extract_strided_slice %686 {offsets = [1, 0], sizes = [1, 4], strides = [1, 1]} : vector<8x4xf32> to vector<1x4xf32>
    %700 = vector.shape_cast %699 : vector<1x4xf32> to vector<1x4xf32>
    %701 = vector.broadcast %700 : vector<1x4xf32> to vector<8x4xf32>
    %702 = vector.extract_strided_slice %686 {offsets = [2, 0], sizes = [1, 4], strides = [1, 1]} : vector<8x4xf32> to vector<1x4xf32>
    %703 = vector.shape_cast %702 : vector<1x4xf32> to vector<1x4xf32>
    %704 = vector.broadcast %703 : vector<1x4xf32> to vector<8x4xf32>
    %705 = vector.extract_strided_slice %686 {offsets = [3, 0], sizes = [1, 4], strides = [1, 1]} : vector<8x4xf32> to vector<1x4xf32>
    %706 = vector.shape_cast %705 : vector<1x4xf32> to vector<1x4xf32>
    %707 = vector.broadcast %706 : vector<1x4xf32> to vector<8x4xf32>
    %708 = vector.extract_strided_slice %686 {offsets = [4, 0], sizes = [1, 4], strides = [1, 1]} : vector<8x4xf32> to vector<1x4xf32>
    %709 = vector.shape_cast %708 : vector<1x4xf32> to vector<1x4xf32>
    %710 = vector.broadcast %709 : vector<1x4xf32> to vector<8x4xf32>
    %711 = vector.extract_strided_slice %686 {offsets = [5, 0], sizes = [1, 4], strides = [1, 1]} : vector<8x4xf32> to vector<1x4xf32>
    %712 = vector.shape_cast %711 : vector<1x4xf32> to vector<1x4xf32>
    %713 = vector.broadcast %712 : vector<1x4xf32> to vector<8x4xf32>
    %714 = vector.extract_strided_slice %686 {offsets = [6, 0], sizes = [1, 4], strides = [1, 1]} : vector<8x4xf32> to vector<1x4xf32>
    %715 = vector.shape_cast %714 : vector<1x4xf32> to vector<1x4xf32>
    %716 = vector.broadcast %715 : vector<1x4xf32> to vector<8x4xf32>
    %717 = vector.extract_strided_slice %686 {offsets = [7, 0], sizes = [1, 4], strides = [1, 1]} : vector<8x4xf32> to vector<1x4xf32>
    %718 = vector.shape_cast %717 : vector<1x4xf32> to vector<1x4xf32>
    %719 = vector.broadcast %718 : vector<1x4xf32> to vector<8x4xf32>
    %720 = arith.mulf %32, %698 : vector<8x4xf32>
    %721 = arith.mulf %56, %698 : vector<8x4xf32>
    %722 = arith.mulf %80, %698 : vector<8x4xf32>
    %723 = arith.addf %29, %722 : vector<8x4xf32>
    %724 = arith.mulf %35, %701 : vector<8x4xf32>
    %725 = arith.addf %720, %724 : vector<8x4xf32>
    %726 = arith.mulf %59, %701 : vector<8x4xf32>
    %727 = arith.addf %721, %726 : vector<8x4xf32>
    %728 = arith.mulf %83, %701 : vector<8x4xf32>
    %729 = arith.addf %723, %728 : vector<8x4xf32>
    %730 = arith.mulf %38, %704 : vector<8x4xf32>
    %731 = arith.addf %725, %730 : vector<8x4xf32>
    %732 = arith.mulf %62, %704 : vector<8x4xf32>
    %733 = arith.addf %727, %732 : vector<8x4xf32>
    %734 = arith.mulf %86, %704 : vector<8x4xf32>
    %735 = arith.addf %729, %734 : vector<8x4xf32>
    %736 = arith.mulf %41, %707 : vector<8x4xf32>
    %737 = arith.addf %731, %736 : vector<8x4xf32>
    %738 = arith.mulf %65, %707 : vector<8x4xf32>
    %739 = arith.addf %733, %738 : vector<8x4xf32>
    %740 = arith.mulf %89, %707 : vector<8x4xf32>
    %741 = arith.addf %735, %740 : vector<8x4xf32>
    %742 = arith.mulf %44, %710 : vector<8x4xf32>
    %743 = arith.addf %737, %742 : vector<8x4xf32>
    %744 = arith.mulf %68, %710 : vector<8x4xf32>
    %745 = arith.addf %739, %744 : vector<8x4xf32>
    %746 = arith.mulf %92, %710 : vector<8x4xf32>
    %747 = arith.addf %741, %746 : vector<8x4xf32>
    %748 = arith.mulf %47, %713 : vector<8x4xf32>
    %749 = arith.addf %743, %748 : vector<8x4xf32>
    %750 = arith.mulf %71, %713 : vector<8x4xf32>
    %751 = arith.addf %745, %750 : vector<8x4xf32>
    %752 = arith.mulf %95, %713 : vector<8x4xf32>
    %753 = arith.addf %747, %752 : vector<8x4xf32>
    %754 = arith.mulf %50, %716 : vector<8x4xf32>
    %755 = arith.addf %749, %754 : vector<8x4xf32>
    %756 = arith.mulf %74, %716 : vector<8x4xf32>
    %757 = arith.addf %751, %756 : vector<8x4xf32>
    %758 = arith.mulf %98, %716 : vector<8x4xf32>
    %759 = arith.addf %753, %758 : vector<8x4xf32>
    %760 = arith.mulf %53, %719 : vector<8x4xf32>
    %761 = arith.addf %755, %760 : vector<8x4xf32>
    %762 = arith.mulf %77, %719 : vector<8x4xf32>
    %763 = arith.addf %757, %762 : vector<8x4xf32>
    %764 = arith.mulf %101, %719 : vector<8x4xf32>
    %765 = arith.addf %759, %764 : vector<8x4xf32>
    %766 = arith.addf %691, %761 : vector<8x4xf32>
    %767 = arith.negf %766 : vector<8x4xf32>
    %768 = math.exp %767 : vector<8x4xf32>
    %cst_24 = arith.constant 1.000000e+00 : f32
    %769 = vector.broadcast %cst_24 : f32 to vector<8x4xf32>
    %770 = arith.addf %769, %768 : vector<8x4xf32>
    %771 = arith.divf %769, %770 : vector<8x4xf32>
    %772 = arith.addf %693, %763 : vector<8x4xf32>
    %773 = arith.negf %772 : vector<8x4xf32>
    %774 = math.exp %773 : vector<8x4xf32>
    %cst_25 = arith.constant 1.000000e+00 : f32
    %775 = vector.broadcast %cst_25 : f32 to vector<8x4xf32>
    %776 = arith.addf %775, %774 : vector<8x4xf32>
    %777 = arith.divf %775, %776 : vector<8x4xf32>
    %778 = arith.mulf %771, %765 : vector<8x4xf32>
    %779 = arith.addf %695, %778 : vector<8x4xf32>
    %780 = math.tanh %779 : vector<8x4xf32>
    %781 = arith.subf %686, %780 : vector<8x4xf32>
    %782 = arith.mulf %777, %781 : vector<8x4xf32>
    %783 = arith.addf %780, %782 : vector<8x4xf32>
    %784 = vector.extract_strided_slice %0 {offsets = [7, 0], sizes = [1, 4], strides = [1, 1]} : vector<8x4xf32> to vector<1x4xf32>
    %785 = vector.shape_cast %784 : vector<1x4xf32> to vector<1x4xf32>
    %786 = vector.broadcast %785 : vector<1x4xf32> to vector<8x4xf32>
    %787 = arith.mulf %8, %786 : vector<8x4xf32>
    %788 = arith.addf %787, %20 : vector<8x4xf32>
    %789 = arith.mulf %11, %786 : vector<8x4xf32>
    %790 = arith.addf %789, %23 : vector<8x4xf32>
    %791 = arith.mulf %14, %786 : vector<8x4xf32>
    %792 = arith.addf %791, %26 : vector<8x4xf32>
    %793 = vector.extract_strided_slice %783 {offsets = [0, 0], sizes = [1, 4], strides = [1, 1]} : vector<8x4xf32> to vector<1x4xf32>
    %794 = vector.shape_cast %793 : vector<1x4xf32> to vector<1x4xf32>
    %795 = vector.broadcast %794 : vector<1x4xf32> to vector<8x4xf32>
    %796 = vector.extract_strided_slice %783 {offsets = [1, 0], sizes = [1, 4], strides = [1, 1]} : vector<8x4xf32> to vector<1x4xf32>
    %797 = vector.shape_cast %796 : vector<1x4xf32> to vector<1x4xf32>
    %798 = vector.broadcast %797 : vector<1x4xf32> to vector<8x4xf32>
    %799 = vector.extract_strided_slice %783 {offsets = [2, 0], sizes = [1, 4], strides = [1, 1]} : vector<8x4xf32> to vector<1x4xf32>
    %800 = vector.shape_cast %799 : vector<1x4xf32> to vector<1x4xf32>
    %801 = vector.broadcast %800 : vector<1x4xf32> to vector<8x4xf32>
    %802 = vector.extract_strided_slice %783 {offsets = [3, 0], sizes = [1, 4], strides = [1, 1]} : vector<8x4xf32> to vector<1x4xf32>
    %803 = vector.shape_cast %802 : vector<1x4xf32> to vector<1x4xf32>
    %804 = vector.broadcast %803 : vector<1x4xf32> to vector<8x4xf32>
    %805 = vector.extract_strided_slice %783 {offsets = [4, 0], sizes = [1, 4], strides = [1, 1]} : vector<8x4xf32> to vector<1x4xf32>
    %806 = vector.shape_cast %805 : vector<1x4xf32> to vector<1x4xf32>
    %807 = vector.broadcast %806 : vector<1x4xf32> to vector<8x4xf32>
    %808 = vector.extract_strided_slice %783 {offsets = [5, 0], sizes = [1, 4], strides = [1, 1]} : vector<8x4xf32> to vector<1x4xf32>
    %809 = vector.shape_cast %808 : vector<1x4xf32> to vector<1x4xf32>
    %810 = vector.broadcast %809 : vector<1x4xf32> to vector<8x4xf32>
    %811 = vector.extract_strided_slice %783 {offsets = [6, 0], sizes = [1, 4], strides = [1, 1]} : vector<8x4xf32> to vector<1x4xf32>
    %812 = vector.shape_cast %811 : vector<1x4xf32> to vector<1x4xf32>
    %813 = vector.broadcast %812 : vector<1x4xf32> to vector<8x4xf32>
    %814 = vector.extract_strided_slice %783 {offsets = [7, 0], sizes = [1, 4], strides = [1, 1]} : vector<8x4xf32> to vector<1x4xf32>
    %815 = vector.shape_cast %814 : vector<1x4xf32> to vector<1x4xf32>
    %816 = vector.broadcast %815 : vector<1x4xf32> to vector<8x4xf32>
    %817 = arith.mulf %32, %795 : vector<8x4xf32>
    %818 = arith.mulf %56, %795 : vector<8x4xf32>
    %819 = arith.mulf %80, %795 : vector<8x4xf32>
    %820 = arith.addf %29, %819 : vector<8x4xf32>
    %821 = arith.mulf %35, %798 : vector<8x4xf32>
    %822 = arith.addf %817, %821 : vector<8x4xf32>
    %823 = arith.mulf %59, %798 : vector<8x4xf32>
    %824 = arith.addf %818, %823 : vector<8x4xf32>
    %825 = arith.mulf %83, %798 : vector<8x4xf32>
    %826 = arith.addf %820, %825 : vector<8x4xf32>
    %827 = arith.mulf %38, %801 : vector<8x4xf32>
    %828 = arith.addf %822, %827 : vector<8x4xf32>
    %829 = arith.mulf %62, %801 : vector<8x4xf32>
    %830 = arith.addf %824, %829 : vector<8x4xf32>
    %831 = arith.mulf %86, %801 : vector<8x4xf32>
    %832 = arith.addf %826, %831 : vector<8x4xf32>
    %833 = arith.mulf %41, %804 : vector<8x4xf32>
    %834 = arith.addf %828, %833 : vector<8x4xf32>
    %835 = arith.mulf %65, %804 : vector<8x4xf32>
    %836 = arith.addf %830, %835 : vector<8x4xf32>
    %837 = arith.mulf %89, %804 : vector<8x4xf32>
    %838 = arith.addf %832, %837 : vector<8x4xf32>
    %839 = arith.mulf %44, %807 : vector<8x4xf32>
    %840 = arith.addf %834, %839 : vector<8x4xf32>
    %841 = arith.mulf %68, %807 : vector<8x4xf32>
    %842 = arith.addf %836, %841 : vector<8x4xf32>
    %843 = arith.mulf %92, %807 : vector<8x4xf32>
    %844 = arith.addf %838, %843 : vector<8x4xf32>
    %845 = arith.mulf %47, %810 : vector<8x4xf32>
    %846 = arith.addf %840, %845 : vector<8x4xf32>
    %847 = arith.mulf %71, %810 : vector<8x4xf32>
    %848 = arith.addf %842, %847 : vector<8x4xf32>
    %849 = arith.mulf %95, %810 : vector<8x4xf32>
    %850 = arith.addf %844, %849 : vector<8x4xf32>
    %851 = arith.mulf %50, %813 : vector<8x4xf32>
    %852 = arith.addf %846, %851 : vector<8x4xf32>
    %853 = arith.mulf %74, %813 : vector<8x4xf32>
    %854 = arith.addf %848, %853 : vector<8x4xf32>
    %855 = arith.mulf %98, %813 : vector<8x4xf32>
    %856 = arith.addf %850, %855 : vector<8x4xf32>
    %857 = arith.mulf %53, %816 : vector<8x4xf32>
    %858 = arith.addf %852, %857 : vector<8x4xf32>
    %859 = arith.mulf %77, %816 : vector<8x4xf32>
    %860 = arith.addf %854, %859 : vector<8x4xf32>
    %861 = arith.mulf %101, %816 : vector<8x4xf32>
    %862 = arith.addf %856, %861 : vector<8x4xf32>
    %863 = arith.addf %788, %858 : vector<8x4xf32>
    %864 = arith.negf %863 : vector<8x4xf32>
    %865 = math.exp %864 : vector<8x4xf32>
    %cst_26 = arith.constant 1.000000e+00 : f32
    %866 = vector.broadcast %cst_26 : f32 to vector<8x4xf32>
    %867 = arith.addf %866, %865 : vector<8x4xf32>
    %868 = arith.divf %866, %867 : vector<8x4xf32>
    %869 = arith.addf %790, %860 : vector<8x4xf32>
    %870 = arith.negf %869 : vector<8x4xf32>
    %871 = math.exp %870 : vector<8x4xf32>
    %cst_27 = arith.constant 1.000000e+00 : f32
    %872 = vector.broadcast %cst_27 : f32 to vector<8x4xf32>
    %873 = arith.addf %872, %871 : vector<8x4xf32>
    %874 = arith.divf %872, %873 : vector<8x4xf32>
    %875 = arith.mulf %868, %862 : vector<8x4xf32>
    %876 = arith.addf %792, %875 : vector<8x4xf32>
    %877 = math.tanh %876 : vector<8x4xf32>
    %878 = arith.subf %783, %877 : vector<8x4xf32>
    %879 = arith.mulf %874, %878 : vector<8x4xf32>
    %880 = arith.addf %877, %879 : vector<8x4xf32>
    %881 = arith.mulf %880, %104 : vector<8x4xf32>
    %cst_28 = arith.constant dense<0.000000e+00> : vector<4xf32>
    %882 = vector.multi_reduction <add>, %881, %cst_28 [0] : vector<8x4xf32> to vector<4xf32>
    %883 = vector.shape_cast %882 : vector<4xf32> to vector<1x4xf32>
    %c0_29 = arith.constant 0 : index
    %c0_30 = arith.constant 0 : index
    %884 = vector.load %arg7[%c0_29, %c0_30] : memref<1x1xf32, #tpu.memory_space<vmem>>, vector<1x1xf32>
    %885 = vector.broadcast %884 : vector<1x1xf32> to vector<1x4xf32>
    %886 = arith.addf %883, %885 : vector<1x4xf32>
    %c0_31 = arith.constant 0 : index
    %c0_32 = arith.constant 0 : index
    %887 = vector.load %arg8[%c0_31, %c0_32] : memref<1x4xf32, #tpu.memory_space<vmem>>, vector<1x4xf32>
    tpu.vector_store %arg8[%c0_31, %c0_32], %886 {strides = array<i32>} : memref<1x4xf32, #tpu.memory_space<vmem>>, vector<1x4xf32>,
    return
  }
}

</mosaic_0001>

<llo_original>
// kernel: tpu_custom_call.1
$region0: #{tpu_custom_call.1}
  #allocation0 [shape = 'u32[]', space=smem, size = 0x4, offset = 0x4, fixed_abs, tag = 'smem constant byte address 0x4 - core index']
  #allocation1 [shape = 'u32[144,128]{1,0:T(1,128)}', space=vmem, size = 0x12000, scoped, tag = 'internal scratch']
  #allocation2 [shape = 'f32[1,1]{1,0:T(1,128)S(1)}', space=vmem, size = 0x200, scoped, tag = 'scoped memory for tpu_custom_call.1']
  %s0 = inlined_call_operand.vmem [shape: f32[8,4], index: 0, kind: input, shape index: {}]
  %s1 = inlined_call_operand.vmem [shape: f32[8,4], index: 1, kind: input, shape index: {}]
  %s2 = inlined_call_operand.vmem [shape: f32[24,1], index: 2, kind: input, shape index: {}]
  %s3 = inlined_call_operand.vmem [shape: f32[24,8], index: 3, kind: input, shape index: {}]
  %s4 = inlined_call_operand.vmem [shape: f32[24,1], index: 4, kind: input, shape index: {}]
  %s5 = inlined_call_operand.vmem [shape: f32[24,1], index: 5, kind: input, shape index: {}]
  %s6 = inlined_call_operand.vmem [shape: f32[8,1], index: 6, kind: input, shape index: {}]
  %s7 = inlined_call_operand.<no memory space> [shape: f32[1,1], index: 7, kind: input, shape index: {}]
  %s8 = inlined_call_operand.hbm [shape: f32[1,4], index: 8, kind: output, shape index: {}]
  %s9 = sld [smem:[#allocation0]]
  $region42: #{tpu_custom_call.1} parent=0
    _
  %s11 = ssub.s32 1, %s9
  %s12 = scalar_select 0, %s11, %s9
  %v13 = vstv %s7
  %14 = vst [vmem:[#allocation2] sm:$0x1] %v13
  $region1: #{tpu_custom_call.1} parent=0
    #allocation3 [shape = 'u8[512]{0}', space=vmem, size = 0x400, scoped, tag = 'output window, operand 0, single buffered']
    #allocation4 [shape = 's32[1]{0}', space=sflag, size = 0x4, scoped, tag = 'scoped memory for tpu_custom_call.1']
    %15 = vsyncpa [#allocation4], 0
    // Predicated region
    $region2: #{tpu_custom_call.1} parent=1 // pred_check
      _
    $region3: #{tpu_custom_call.1} parent=1 // pred_check_branch
      %17 = sbr.rel (0) target = $region5
    $region4: #{tpu_custom_call.1} parent=1 // pred_region
      _
    $region5: #{tpu_custom_call.1} parent=1 // pred_fallthru
      _
    // Predicated region
    $region6: #{tpu_custom_call.1} parent=1 // pred_check
      _
    $region7: #{tpu_custom_call.1} parent=1 // pred_check_branch
      %19 = sbr.rel (0) target = $region9
    $region8: #{tpu_custom_call.1} parent=1 // pred_region
      _
    $region9: #{tpu_custom_call.1} parent=1 // pred_fallthru
      _
    // Predicated region
    $region10: #{tpu_custom_call.1} parent=1 // pred_check
      _
    $region11: #{tpu_custom_call.1} parent=1 // pred_check_branch
      %21 = sbr.rel (0) target = $region13
    $region12: #{tpu_custom_call.1} parent=1 // pred_region
      _
    $region13: #{tpu_custom_call.1} parent=1 // pred_fallthru
      _
    // Predicated region
    $region14: #{tpu_custom_call.1} parent=1 // pred_check
      _
    $region15: #{tpu_custom_call.1} parent=1 // pred_check_branch
      %23 = sbr.rel (0) target = $region17
    $region16: #{tpu_custom_call.1} parent=1 // pred_region
      _
    $region17: #{tpu_custom_call.1} parent=1 // pred_fallthru
      _
    // Predicated region
    $region18: #{tpu_custom_call.1} parent=1 // pred_check
      _
    $region19: #{tpu_custom_call.1} parent=1 // pred_check_branch
      %25 = sbr.rel (0) target = $region21
    $region20: #{tpu_custom_call.1} parent=1 // pred_region
      _
    $region21: #{tpu_custom_call.1} parent=1 // pred_fallthru
      _
    // Predicated region
    $region22: #{tpu_custom_call.1} parent=1 // pred_check
      _
    $region23: #{tpu_custom_call.1} parent=1 // pred_check_branch
      %27 = sbr.rel (0) target = $region25
    $region24: #{tpu_custom_call.1} parent=1 // pred_region
      _
    $region25: #{tpu_custom_call.1} parent=1 // pred_fallthru
      _
    // Predicated region
    $region26: #{tpu_custom_call.1} parent=1 // pred_check
      _
    $region27: #{tpu_custom_call.1} parent=1 // pred_check_branch
      %29 = sbr.rel (0) target = $region29
    $region28: #{tpu_custom_call.1} parent=1 // pred_region
      _
    $region29: #{tpu_custom_call.1} parent=1 // pred_fallthru
      _
    // Predicated region
    $region30: #{tpu_custom_call.1} parent=1 // pred_check
      _
    $region31: #{tpu_custom_call.1} parent=1 // pred_check_branch
      %31 = sbr.rel (0) target = $region33
    $region32: #{tpu_custom_call.1} parent=1 // pred_region
      _
    $region33: #{tpu_custom_call.1} parent=1 // pred_fallthru
      _
    %v32 = vld [vmem:[%s0] sm:$0xff]
    %v33 = vld [vmem:[%s1] sm:$0xff]
    %v34 = vld [vmem:[%s2] sm:$0xff]
    %v35 = vld [vmem:[%s2 + $0x8] sm:$0xff]
    %v36 = vld [vmem:[%s2 + $0x10] sm:$0xff]
    %v37 = vld [vmem:[%s3] sm:$0xff]
    %v38 = vld [vmem:[%s3 + $0x8] sm:$0xff]
    %v39 = vld [vmem:[%s3 + $0x10] sm:$0xff]
    %v40 = vld [vmem:[%s4] sm:$0xff]
    %v41 = vld [vmem:[%s4 + $0x8] sm:$0xff]
    %v42 = vld [vmem:[%s4 + $0x10] sm:$0xff]
    %v43 = vld [vmem:[%s5] sm:$0xff]
    %v44 = vld [vmem:[%s5 + $0x8] sm:$0xff]
    %v45 = vld [vmem:[%s5 + $0x10] sm:$0xff]
    %47 = vset.pattern.permute.xlu0 0
    %48 = vperm.xlu0 %47, %v34
    %v49 = vpop.permute.xlu0 %48
    %52 = vset.pattern.permute.xlu0 0
    %53 = vperm.xlu0 %52, %v35
    %v54 = vpop.permute.xlu0 %53
    %57 = vset.pattern.permute.xlu0 0
    %58 = vperm.xlu0 %57, %v36
    %v59 = vpop.permute.xlu0 %58
    %v61 = vadd.f32 %v40, %v43
    %v62 = vadd.f32 %v41, %v44
    %64 = vset.pattern.permute.xlu0 0
    %65 = vperm.xlu0 %64, %v61
    %v66 = vpop.permute.xlu0 %65
    %69 = vset.pattern.permute.xlu0 0
    %70 = vperm.xlu0 %69, %v62
    %v71 = vpop.permute.xlu0 %70
    %74 = vset.pattern.permute.xlu0 0
    %75 = vperm.xlu0 %74, %v42
    %v76 = vpop.permute.xlu0 %75
    %79 = vset.pattern.permute.xlu0 0
    %80 = vperm.xlu0 %79, %v45
    %v81 = vpop.permute.xlu0 %80
    %84 = vset.pattern.permute.xlu0 0
    %85 = vperm.xlu0 %84, %v37
    %v86 = vpop.permute.xlu0 %85
    %88 = vset.pattern.permute.xlu0 1
    %89 = vperm.xlu0 %88, %v37
    %v90 = vpop.permute.xlu0 %89
    %92 = vset.pattern.permute.xlu0 2
    %93 = vperm.xlu0 %92, %v37
    %v94 = vpop.permute.xlu0 %93
    %96 = vset.pattern.permute.xlu0 3
    %97 = vperm.xlu0 %96, %v37
    %v98 = vpop.permute.xlu0 %97
    %100 = vset.pattern.permute.xlu0 4
    %101 = vperm.xlu0 %100, %v37
    %v102 = vpop.permute.xlu0 %101
    %104 = vset.pattern.permute.xlu0 5
    %105 = vperm.xlu0 %104, %v37
    %v106 = vpop.permute.xlu0 %105
    %108 = vset.pattern.permute.xlu0 6
    %109 = vperm.xlu0 %108, %v37
    %v110 = vpop.permute.xlu0 %109
    %112 = vset.pattern.permute.xlu0 7
    %113 = vperm.xlu0 %112, %v37
    %v114 = vpop.permute.xlu0 %113
    %117 = vset.pattern.permute.xlu0 0
    %118 = vperm.xlu0 %117, %v38
    %v119 = vpop.permute.xlu0 %118
    %121 = vset.pattern.permute.xlu0 1
    %122 = vperm.xlu0 %121, %v38
    %v123 = vpop.permute.xlu0 %122
    %125 = vset.pattern.permute.xlu0 2
    %126 = vperm.xlu0 %125, %v38
    %v127 = vpop.permute.xlu0 %126
    %129 = vset.pattern.permute.xlu0 3
    %130 = vperm.xlu0 %129, %v38
    %v131 = vpop.permute.xlu0 %130
    %133 = vset.pattern.permute.xlu0 4
    %134 = vperm.xlu0 %133, %v38
    %v135 = vpop.permute.xlu0 %134
    %137 = vset.pattern.permute.xlu0 5
    %138 = vperm.xlu0 %137, %v38
    %v139 = vpop.permute.xlu0 %138
    %141 = vset.pattern.permute.xlu0 6
    %142 = vperm.xlu0 %141, %v38
    %v143 = vpop.permute.xlu0 %142
    %145 = vset.pattern.permute.xlu0 7
    %146 = vperm.xlu0 %145, %v38
    %v147 = vpop.permute.xlu0 %146
    %150 = vset.pattern.permute.xlu0 0
    %151 = vperm.xlu0 %150, %v39
    %v152 = vpop.permute.xlu0 %151
    %154 = vset.pattern.permute.xlu0 1
    %155 = vperm.xlu0 %154, %v39
    %v156 = vpop.permute.xlu0 %155
    %158 = vset.pattern.permute.xlu0 2
    %159 = vperm.xlu0 %158, %v39
    %v160 = vpop.permute.xlu0 %159
    %162 = vset.pattern.permute.xlu0 3
    %163 = vperm.xlu0 %162, %v39
    %v164 = vpop.permute.xlu0 %163
    %166 = vset.pattern.permute.xlu0 4
    %167 = vperm.xlu0 %166, %v39
    %v168 = vpop.permute.xlu0 %167
    %170 = vset.pattern.permute.xlu0 5
    %171 = vperm.xlu0 %170, %v39
    %v172 = vpop.permute.xlu0 %171
    %174 = vset.pattern.permute.xlu0 6
    %175 = vperm.xlu0 %174, %v39
    %v176 = vpop.permute.xlu0 %175
    %178 = vset.pattern.permute.xlu0 7
    %179 = vperm.xlu0 %178, %v39
    %v180 = vpop.permute.xlu0 %179
    %v182 = vld [vmem:[%s6] sm:$0xff]
    %184 = vset.pattern.permute.xlu0 0
    %185 = vperm.xlu0 %184, %v182
    %v186 = vpop.permute.xlu0 %185
    %v188 = vlaneseq
    %v189 = vshrl.u32 %v188, 7
    %v190 = vsub.s32 0, %v189
    %v191 = vrot.slane %v32, %v190
    %v192 = vmul.f32 %v49, %v191
    %v193 = vadd.f32 %v192, %v66
    %v194 = vmul.f32 %v54, %v191
    %v195 = vadd.f32 %v194, %v71
    %v196 = vmul.f32 %v59, %v191
    %v197 = vadd.f32 %v196, %v76
    %v198 = vlaneseq
    %v199 = vshrl.u32 %v198, 7
    %v200 = vsub.s32 0, %v199
    %v201 = vrot.slane %v33, %v200
    %v202 = vlaneseq
    %v203 = vshrl.u32 %v202, 7
    %v204 = vsub.s32 1, %v203
    %v205 = vrot.slane %v33, %v204
    %v206 = vlaneseq
    %v207 = vshrl.u32 %v206, 7
    %v208 = vsub.s32 2, %v207
    %v209 = vrot.slane %v33, %v208
    %v210 = vlaneseq
    %v211 = vshrl.u32 %v210, 7
    %v212 = vsub.s32 3, %v211
    %v213 = vrot.slane %v33, %v212
    %v214 = vlaneseq
    %v215 = vshrl.u32 %v214, 7
    %v216 = vsub.s32 4, %v215
    %v217 = vrot.slane %v33, %v216
    %v218 = vlaneseq
    %v219 = vshrl.u32 %v218, 7
    %v220 = vsub.s32 5, %v219
    %v221 = vrot.slane %v33, %v220
    %v222 = vlaneseq
    %v223 = vshrl.u32 %v222, 7
    %v224 = vsub.s32 6, %v223
    %v225 = vrot.slane %v33, %v224
    %v226 = vlaneseq
    %v227 = vshrl.u32 %v226, 7
    %v228 = vsub.s32 7, %v227
    %v229 = vrot.slane %v33, %v228
    %v230 = vmul.f32 %v86, %v201
    %v231 = vmul.f32 %v119, %v201
    %v232 = vmul.f32 %v152, %v201
    %v233 = vadd.f32 %v81, %v232
    %v234 = vmul.f32 %v90, %v205
    %v235 = vadd.f32 %v230, %v234
    %v236 = vmul.f32 %v123, %v205
    %v237 = vadd.f32 %v231, %v236
    %v238 = vmul.f32 %v156, %v205
    %v239 = vadd.f32 %v233, %v238
    %v240 = vmul.f32 %v94, %v209
    %v241 = vadd.f32 %v235, %v240
    %v242 = vmul.f32 %v127, %v209
    %v243 = vadd.f32 %v237, %v242
    %v244 = vmul.f32 %v160, %v209
    %v245 = vadd.f32 %v239, %v244
    %v246 = vmul.f32 %v98, %v213
    %v247 = vadd.f32 %v241, %v246
    %v248 = vmul.f32 %v131, %v213
    %v249 = vadd.f32 %v243, %v248
    %v250 = vmul.f32 %v164, %v213
    %v251 = vadd.f32 %v245, %v250
    %v252 = vmul.f32 %v102, %v217
    %v253 = vadd.f32 %v247, %v252
    %v254 = vmul.f32 %v135, %v217
    %v255 = vadd.f32 %v249, %v254
    %v256 = vmul.f32 %v168, %v217
    %v257 = vadd.f32 %v251, %v256
    %v258 = vmul.f32 %v106, %v221
    %v259 = vadd.f32 %v253, %v258
    %v260 = vmul.f32 %v139, %v221
    %v261 = vadd.f32 %v255, %v260
    %v262 = vmul.f32 %v172, %v221
    %v263 = vadd.f32 %v257, %v262
    %v264 = vmul.f32 %v110, %v225
    %v265 = vadd.f32 %v259, %v264
    %v266 = vmul.f32 %v143, %v225
    %v267 = vadd.f32 %v261, %v266
    %v268 = vmul.f32 %v176, %v225
    %v269 = vadd.f32 %v263, %v268
    %v270 = vmul.f32 %v114, %v229
    %v271 = vadd.f32 %v265, %v270
    %v272 = vmul.f32 %v147, %v229
    %v273 = vadd.f32 %v267, %v272
    %v274 = vmul.f32 %v180, %v229
    %v275 = vadd.f32 %v269, %v274
    %v276 = vadd.f32 %v193, %v271
    %v277 = vxor.u32 %v276, 2147483648
    %v278 = vmul.f32 %v277, 1.442695
    %v279 = vpow.pop %v278
    %v280 = vadd.f32 %v279, 1.0
    %v281 = vrcp.pop %v280
    %v282 = vmul.f32 1.0, %v281
    %v283 = vadd.f32 %v195, %v273
    %v284 = vxor.u32 %v283, 2147483648
    %v285 = vmul.f32 %v284, 1.442695
    %v286 = vpow.pop %v285
    %v287 = vadd.f32 %v286, 1.0
    %v288 = vrcp.pop %v287
    %v289 = vmul.f32 1.0, %v288
    %v290 = vmul.f32 %v282, %v275
    %v291 = vadd.f32 %v197, %v290
    %v292 = vtanh.pop %v291
    %v293 = vsub.f32 %v33, %v292
    %v294 = vmul.f32 %v289, %v293
    %v295 = vadd.f32 %v292, %v294
    %v296 = vlaneseq
    %v297 = vshrl.u32 %v296, 7
    %v298 = vsub.s32 1, %v297
    %v299 = vrot.slane %v32, %v298
    %v300 = vmul.f32 %v49, %v299
    %v301 = vadd.f32 %v300, %v66
    %v302 = vmul.f32 %v54, %v299
    %v303 = vadd.f32 %v302, %v71
    %v304 = vmul.f32 %v59, %v299
    %v305 = vadd.f32 %v304, %v76
    %v306 = vlaneseq
    %v307 = vshrl.u32 %v306, 7
    %v308 = vsub.s32 0, %v307
    %v309 = vrot.slane %v295, %v308
    %v310 = vlaneseq
    %v311 = vshrl.u32 %v310, 7
    %v312 = vsub.s32 1, %v311
    %v313 = vrot.slane %v295, %v312
    %v314 = vlaneseq
    %v315 = vshrl.u32 %v314, 7
    %v316 = vsub.s32 2, %v315
    %v317 = vrot.slane %v295, %v316
    %v318 = vlaneseq
    %v319 = vshrl.u32 %v318, 7
    %v320 = vsub.s32 3, %v319
    %v321 = vrot.slane %v295, %v320
    %v322 = vlaneseq
    %v323 = vshrl.u32 %v322, 7
    %v324 = vsub.s32 4, %v323
    %v325 = vrot.slane %v295, %v324
    %v326 = vlaneseq
    %v327 = vshrl.u32 %v326, 7
    %v328 = vsub.s32 5, %v327
    %v329 = vrot.slane %v295, %v328
    %v330 = vlaneseq
    %v331 = vshrl.u32 %v330, 7
    %v332 = vsub.s32 6, %v331
    %v333 = vrot.slane %v295, %v332
    %v334 = vlaneseq
    %v335 = vshrl.u32 %v334, 7
    %v336 = vsub.s32 7, %v335
    %v337 = vrot.slane %v295, %v336
    %v338 = vmul.f32 %v86, %v309
    %v339 = vmul.f32 %v119, %v309
    %v340 = vmul.f32 %v152, %v309
    %v341 = vadd.f32 %v81, %v340
    %v342 = vmul.f32 %v90, %v313
    %v343 = vadd.f32 %v338, %v342
    %v344 = vmul.f32 %v123, %v313
    %v345 = vadd.f32 %v339, %v344
    %v346 = vmul.f32 %v156, %v313
    %v347 = vadd.f32 %v341, %v346
    %v348 = vmul.f32 %v94, %v317
    %v349 = vadd.f32 %v343, %v348
    %v350 = vmul.f32 %v127, %v317
    %v351 = vadd.f32 %v345, %v350
    %v352 = vmul.f32 %v160, %v317
    %v353 = vadd.f32 %v347, %v352
    %v354 = vmul.f32 %v98, %v321
    %v355 = vadd.f32 %v349, %v354
    %v356 = vmul.f32 %v131, %v321
    %v357 = vadd.f32 %v351, %v356
    %v358 = vmul.f32 %v164, %v321
    %v359 = vadd.f32 %v353, %v358
    %v360 = vmul.f32 %v102, %v325
    %v361 = vadd.f32 %v355, %v360
    %v362 = vmul.f32 %v135, %v325
    %v363 = vadd.f32 %v357, %v362
    %v364 = vmul.f32 %v168, %v325
    %v365 = vadd.f32 %v359, %v364
    %v366 = vmul.f32 %v106, %v329
    %v367 = vadd.f32 %v361, %v366
    %v368 = vmul.f32 %v139, %v329
    %v369 = vadd.f32 %v363, %v368
    %v370 = vmul.f32 %v172, %v329
    %v371 = vadd.f32 %v365, %v370
    %v372 = vmul.f32 %v110, %v333
    %v373 = vadd.f32 %v367, %v372
    %v374 = vmul.f32 %v143, %v333
    %v375 = vadd.f32 %v369, %v374
    %v376 = vmul.f32 %v176, %v333
    %v377 = vadd.f32 %v371, %v376
    %v378 = vmul.f32 %v114, %v337
    %v379 = vadd.f32 %v373, %v378
    %v380 = vmul.f32 %v147, %v337
    %v381 = vadd.f32 %v375, %v380
    %v382 = vmul.f32 %v180, %v337
    %v383 = vadd.f32 %v377, %v382
    %v384 = vadd.f32 %v301, %v379
    %v385 = vxor.u32 %v384, 2147483648
    %v386 = vmul.f32 %v385, 1.442695
    %v387 = vpow.pop %v386
    %v388 = vadd.f32 %v387, 1.0
    %v389 = vrcp.pop %v388
    %v390 = vmul.f32 1.0, %v389
    %v391 = vadd.f32 %v303, %v381
    %v392 = vxor.u32 %v391, 2147483648
    %v393 = vmul.f32 %v392, 1.442695
    %v394 = vpow.pop %v393
    %v395 = vadd.f32 %v394, 1.0
    %v396 = vrcp.pop %v395
    %v397 = vmul.f32 1.0, %v396
    %v398 = vmul.f32 %v390, %v383
    %v399 = vadd.f32 %v305, %v398
    %v400 = vtanh.pop %v399
    %v401 = vsub.f32 %v295, %v400
    %v402 = vmul.f32 %v397, %v401
    %v403 = vadd.f32 %v400, %v402
    %v404 = vlaneseq
    %v405 = vshrl.u32 %v404, 7
    %v406 = vsub.s32 2, %v405
    %v407 = vrot.slane %v32, %v406
    %v408 = vmul.f32 %v49, %v407
    %v409 = vadd.f32 %v408, %v66
    %v410 = vmul.f32 %v54, %v407
    %v411 = vadd.f32 %v410, %v71
    %v412 = vmul.f32 %v59, %v407
    %v413 = vadd.f32 %v412, %v76
    %v414 = vlaneseq
    %v415 = vshrl.u32 %v414, 7
    %v416 = vsub.s32 0, %v415
    %v417 = vrot.slane %v403, %v416
    %v418 = vlaneseq
    %v419 = vshrl.u32 %v418, 7
    %v420 = vsub.s32 1, %v419
    %v421 = vrot.slane %v403, %v420
    %v422 = vlaneseq
    %v423 = vshrl.u32 %v422, 7
    %v424 = vsub.s32 2, %v423
    %v425 = vrot.slane %v403, %v424
    %v426 = vlaneseq
    %v427 = vshrl.u32 %v426, 7
    %v428 = vsub.s32 3, %v427
    %v429 = vrot.slane %v403, %v428
    %v430 = vlaneseq
    %v431 = vshrl.u32 %v430, 7
    %v432 = vsub.s32 4, %v431
    %v433 = vrot.slane %v403, %v432
    %v434 = vlaneseq
    %v435 = vshrl.u32 %v434, 7
    %v436 = vsub.s32 5, %v435
    %v437 = vrot.slane %v403, %v436
    %v438 = vlaneseq
    %v439 = vshrl.u32 %v438, 7
    %v440 = vsub.s32 6, %v439
    %v441 = vrot.slane %v403, %v440
    %v442 = vlaneseq
    %v443 = vshrl.u32 %v442, 7
    %v444 = vsub.s32 7, %v443
    %v445 = vrot.slane %v403, %v444
    %v446 = vmul.f32 %v86, %v417
    %v447 = vmul.f32 %v119, %v417
    %v448 = vmul.f32 %v152, %v417
    %v449 = vadd.f32 %v81, %v448
    %v450 = vmul.f32 %v90, %v421
    %v451 = vadd.f32 %v446, %v450
    %v452 = vmul.f32 %v123, %v421
    %v453 = vadd.f32 %v447, %v452
    %v454 = vmul.f32 %v156, %v421
    %v455 = vadd.f32 %v449, %v454
    %v456 = vmul.f32 %v94, %v425
    %v457 = vadd.f32 %v451, %v456
    %v458 = vmul.f32 %v127, %v425
    %v459 = vadd.f32 %v453, %v458
    %v460 = vmul.f32 %v160, %v425
    %v461 = vadd.f32 %v455, %v460
    %v462 = vmul.f32 %v98, %v429
    %v463 = vadd.f32 %v457, %v462
    %v464 = vmul.f32 %v131, %v429
    %v465 = vadd.f32 %v459, %v464
    %v466 = vmul.f32 %v164, %v429
    %v467 = vadd.f32 %v461, %v466
    %v468 = vmul.f32 %v102, %v433
    %v469 = vadd.f32 %v463, %v468
    %v470 = vmul.f32 %v135, %v433
    %v471 = vadd.f32 %v465, %v470
    %v472 = vmul.f32 %v168, %v433
    %v473 = vadd.f32 %v467, %v472
    %v474 = vmul.f32 %v106, %v437
    %v475 = vadd.f32 %v469, %v474
    %v476 = vmul.f32 %v139, %v437
    %v477 = vadd.f32 %v471, %v476
    %v478 = vmul.f32 %v172, %v437
    %v479 = vadd.f32 %v473, %v478
    %v480 = vmul.f32 %v110, %v441
    %v481 = vadd.f32 %v475, %v480
    %v482 = vmul.f32 %v143, %v441
    %v483 = vadd.f32 %v477, %v482
    %v484 = vmul.f32 %v176, %v441
    %v485 = vadd.f32 %v479, %v484
    %v486 = vmul.f32 %v114, %v445
    %v487 = vadd.f32 %v481, %v486
    %v488 = vmul.f32 %v147, %v445
    %v489 = vadd.f32 %v483, %v488
    %v490 = vmul.f32 %v180, %v445
    %v491 = vadd.f32 %v485, %v490
    %v492 = vadd.f32 %v409, %v487
    %v493 = vxor.u32 %v492, 2147483648
    %v494 = vmul.f32 %v493, 1.442695
    %v495 = vpow.pop %v494
    %v496 = vadd.f32 %v495, 1.0
    %v497 = vrcp.pop %v496
    %v498 = vmul.f32 1.0, %v497
    %v499 = vadd.f32 %v411, %v489
    %v500 = vxor.u32 %v499, 2147483648
    %v501 = vmul.f32 %v500, 1.442695
    %v502 = vpow.pop %v501
    %v503 = vadd.f32 %v502, 1.0
    %v504 = vrcp.pop %v503
    %v505 = vmul.f32 1.0, %v504
    %v506 = vmul.f32 %v498, %v491
    %v507 = vadd.f32 %v413, %v506
    %v508 = vtanh.pop %v507
    %v509 = vsub.f32 %v403, %v508
    %v510 = vmul.f32 %v505, %v509
    %v511 = vadd.f32 %v508, %v510
    %v512 = vlaneseq
    %v513 = vshrl.u32 %v512, 7
    %v514 = vsub.s32 3, %v513
    %v515 = vrot.slane %v32, %v514
    %v516 = vmul.f32 %v49, %v515
    %v517 = vadd.f32 %v516, %v66
    %v518 = vmul.f32 %v54, %v515
    %v519 = vadd.f32 %v518, %v71
    %v520 = vmul.f32 %v59, %v515
    %v521 = vadd.f32 %v520, %v76
    %v522 = vlaneseq
    %v523 = vshrl.u32 %v522, 7
    %v524 = vsub.s32 0, %v523
    %v525 = vrot.slane %v511, %v524
    %v526 = vlaneseq
    %v527 = vshrl.u32 %v526, 7
    %v528 = vsub.s32 1, %v527
    %v529 = vrot.slane %v511, %v528
    %v530 = vlaneseq
    %v531 = vshrl.u32 %v530, 7
    %v532 = vsub.s32 2, %v531
    %v533 = vrot.slane %v511, %v532
    %v534 = vlaneseq
    %v535 = vshrl.u32 %v534, 7
    %v536 = vsub.s32 3, %v535
    %v537 = vrot.slane %v511, %v536
    %v538 = vlaneseq
    %v539 = vshrl.u32 %v538, 7
    %v540 = vsub.s32 4, %v539
    %v541 = vrot.slane %v511, %v540
    %v542 = vlaneseq
    %v543 = vshrl.u32 %v542, 7
    %v544 = vsub.s32 5, %v543
    %v545 = vrot.slane %v511, %v544
    %v546 = vlaneseq
    %v547 = vshrl.u32 %v546, 7
    %v548 = vsub.s32 6, %v547
    %v549 = vrot.slane %v511, %v548
    %v550 = vlaneseq
    %v551 = vshrl.u32 %v550, 7
    %v552 = vsub.s32 7, %v551
    %v553 = vrot.slane %v511, %v552
    %v554 = vmul.f32 %v86, %v525
    %v555 = vmul.f32 %v119, %v525
    %v556 = vmul.f32 %v152, %v525
    %v557 = vadd.f32 %v81, %v556
    %v558 = vmul.f32 %v90, %v529
    %v559 = vadd.f32 %v554, %v558
    %v560 = vmul.f32 %v123, %v529
    %v561 = vadd.f32 %v555, %v560
    %v562 = vmul.f32 %v156, %v529
    %v563 = vadd.f32 %v557, %v562
    %v564 = vmul.f32 %v94, %v533
    %v565 = vadd.f32 %v559, %v564
    %v566 = vmul.f32 %v127, %v533
    %v567 = vadd.f32 %v561, %v566
    %v568 = vmul.f32 %v160, %v533
    %v569 = vadd.f32 %v563, %v568
    %v570 = vmul.f32 %v98, %v537
    %v571 = vadd.f32 %v565, %v570
    %v572 = vmul.f32 %v131, %v537
    %v573 = vadd.f32 %v567, %v572
    %v574 = vmul.f32 %v164, %v537
    %v575 = vadd.f32 %v569, %v574
    %v576 = vmul.f32 %v102, %v541
    %v577 = vadd.f32 %v571, %v576
    %v578 = vmul.f32 %v135, %v541
    %v579 = vadd.f32 %v573, %v578
    %v580 = vmul.f32 %v168, %v541
    %v581 = vadd.f32 %v575, %v580
    %v582 = vmul.f32 %v106, %v545
    %v583 = vadd.f32 %v577, %v582
    %v584 = vmul.f32 %v139, %v545
    %v585 = vadd.f32 %v579, %v584
    %v586 = vmul.f32 %v172, %v545
    %v587 = vadd.f32 %v581, %v586
    %v588 = vmul.f32 %v110, %v549
    %v589 = vadd.f32 %v583, %v588
    %v590 = vmul.f32 %v143, %v549
    %v591 = vadd.f32 %v585, %v590
    %v592 = vmul.f32 %v176, %v549
    %v593 = vadd.f32 %v587, %v592
    %v594 = vmul.f32 %v114, %v553
    %v595 = vadd.f32 %v589, %v594
    %v596 = vmul.f32 %v147, %v553
    %v597 = vadd.f32 %v591, %v596
    %v598 = vmul.f32 %v180, %v553
    %v599 = vadd.f32 %v593, %v598
    %v600 = vadd.f32 %v517, %v595
    %v601 = vxor.u32 %v600, 2147483648
    %v602 = vmul.f32 %v601, 1.442695
    %v603 = vpow.pop %v602
    %v604 = vadd.f32 %v603, 1.0
    %v605 = vrcp.pop %v604
    %v606 = vmul.f32 1.0, %v605
    %v607 = vadd.f32 %v519, %v597
    %v608 = vxor.u32 %v607, 2147483648
    %v609 = vmul.f32 %v608, 1.442695
    %v610 = vpow.pop %v609
    %v611 = vadd.f32 %v610, 1.0
    %v612 = vrcp.pop %v611
    %v613 = vmul.f32 1.0, %v612
    %v614 = vmul.f32 %v606, %v599
    %v615 = vadd.f32 %v521, %v614
    %v616 = vtanh.pop %v615
    %v617 = vsub.f32 %v511, %v616
    %v618 = vmul.f32 %v613, %v617
    %v619 = vadd.f32 %v616, %v618
    %v620 = vlaneseq
    %v621 = vshrl.u32 %v620, 7
    %v622 = vsub.s32 4, %v621
    %v623 = vrot.slane %v32, %v622
    %v624 = vmul.f32 %v49, %v623
    %v625 = vadd.f32 %v624, %v66
    %v626 = vmul.f32 %v54, %v623
    %v627 = vadd.f32 %v626, %v71
    %v628 = vmul.f32 %v59, %v623
    %v629 = vadd.f32 %v628, %v76
    %v630 = vlaneseq
    %v631 = vshrl.u32 %v630, 7
    %v632 = vsub.s32 0, %v631
    %v633 = vrot.slane %v619, %v632
    %v634 = vlaneseq
    %v635 = vshrl.u32 %v634, 7
    %v636 = vsub.s32 1, %v635
    %v637 = vrot.slane %v619, %v636
    %v638 = vlaneseq
    %v639 = vshrl.u32 %v638, 7
    %v640 = vsub.s32 2, %v639
    %v641 = vrot.slane %v619, %v640
    %v642 = vlaneseq
    %v643 = vshrl.u32 %v642, 7
    %v644 = vsub.s32 3, %v643
    %v645 = vrot.slane %v619, %v644
    %v646 = vlaneseq
    %v647 = vshrl.u32 %v646, 7
    %v648 = vsub.s32 4, %v647
    %v649 = vrot.slane %v619, %v648
    %v650 = vlaneseq
    %v651 = vshrl.u32 %v650, 7
    %v652 = vsub.s32 5, %v651
    %v653 = vrot.slane %v619, %v652
    %v654 = vlaneseq
    %v655 = vshrl.u32 %v654, 7
    %v656 = vsub.s32 6, %v655
    %v657 = vrot.slane %v619, %v656
    %v658 = vlaneseq
    %v659 = vshrl.u32 %v658, 7
    %v660 = vsub.s32 7, %v659
    %v661 = vrot.slane %v619, %v660
    %v662 = vmul.f32 %v86, %v633
    %v663 = vmul.f32 %v119, %v633
    %v664 = vmul.f32 %v152, %v633
    %v665 = vadd.f32 %v81, %v664
    %v666 = vmul.f32 %v90, %v637
    %v667 = vadd.f32 %v662, %v666
    %v668 = vmul.f32 %v123, %v637
    %v669 = vadd.f32 %v663, %v668
    %v670 = vmul.f32 %v156, %v637
    %v671 = vadd.f32 %v665, %v670
    %v672 = vmul.f32 %v94, %v641
    %v673 = vadd.f32 %v667, %v672
    %v674 = vmul.f32 %v127, %v641
    %v675 = vadd.f32 %v669, %v674
    %v676 = vmul.f32 %v160, %v641
    %v677 = vadd.f32 %v671, %v676
    %v678 = vmul.f32 %v98, %v645
    %v679 = vadd.f32 %v673, %v678
    %v680 = vmul.f32 %v131, %v645
    %v681 = vadd.f32 %v675, %v680
    %v682 = vmul.f32 %v164, %v645
    %v683 = vadd.f32 %v677, %v682
    %v684 = vmul.f32 %v102, %v649
    %v685 = vadd.f32 %v679, %v684
    %v686 = vmul.f32 %v135, %v649
    %v687 = vadd.f32 %v681, %v686
    %v688 = vmul.f32 %v168, %v649
    %v689 = vadd.f32 %v683, %v688
    %v690 = vmul.f32 %v106, %v653
    %v691 = vadd.f32 %v685, %v690
    %v692 = vmul.f32 %v139, %v653
    %v693 = vadd.f32 %v687, %v692
    %v694 = vmul.f32 %v172, %v653
    %v695 = vadd.f32 %v689, %v694
    %v696 = vmul.f32 %v110, %v657
    %v697 = vadd.f32 %v691, %v696
    %v698 = vmul.f32 %v143, %v657
    %v699 = vadd.f32 %v693, %v698
    %v700 = vmul.f32 %v176, %v657
    %v701 = vadd.f32 %v695, %v700
    %v702 = vmul.f32 %v114, %v661
    %v703 = vadd.f32 %v697, %v702
    %v704 = vmul.f32 %v147, %v661
    %v705 = vadd.f32 %v699, %v704
    %v706 = vmul.f32 %v180, %v661
    %v707 = vadd.f32 %v701, %v706
    %v708 = vadd.f32 %v625, %v703
    %v709 = vxor.u32 %v708, 2147483648
    %v710 = vmul.f32 %v709, 1.442695
    %v711 = vpow.pop %v710
    %v712 = vadd.f32 %v711, 1.0
    %v713 = vrcp.pop %v712
    %v714 = vmul.f32 1.0, %v713
    %v715 = vadd.f32 %v627, %v705
    %v716 = vxor.u32 %v715, 2147483648
    %v717 = vmul.f32 %v716, 1.442695
    %v718 = vpow.pop %v717
    %v719 = vadd.f32 %v718, 1.0
    %v720 = vrcp.pop %v719
    %v721 = vmul.f32 1.0, %v720
    %v722 = vmul.f32 %v714, %v707
    %v723 = vadd.f32 %v629, %v722
    %v724 = vtanh.pop %v723
    %v725 = vsub.f32 %v619, %v724
    %v726 = vmul.f32 %v721, %v725
    %v727 = vadd.f32 %v724, %v726
    %v728 = vlaneseq
    %v729 = vshrl.u32 %v728, 7
    %v730 = vsub.s32 5, %v729
    %v731 = vrot.slane %v32, %v730
    %v732 = vmul.f32 %v49, %v731
    %v733 = vadd.f32 %v732, %v66
    %v734 = vmul.f32 %v54, %v731
    %v735 = vadd.f32 %v734, %v71
    %v736 = vmul.f32 %v59, %v731
    %v737 = vadd.f32 %v736, %v76
    %v738 = vlaneseq
    %v739 = vshrl.u32 %v738, 7
    %v740 = vsub.s32 0, %v739
    %v741 = vrot.slane %v727, %v740
    %v742 = vlaneseq
    %v743 = vshrl.u32 %v742, 7
    %v744 = vsub.s32 1, %v743
    %v745 = vrot.slane %v727, %v744
    %v746 = vlaneseq
    %v747 = vshrl.u32 %v746, 7
    %v748 = vsub.s32 2, %v747
    %v749 = vrot.slane %v727, %v748
    %v750 = vlaneseq
    %v751 = vshrl.u32 %v750, 7
    %v752 = vsub.s32 3, %v751
    %v753 = vrot.slane %v727, %v752
    %v754 = vlaneseq
    %v755 = vshrl.u32 %v754, 7
    %v756 = vsub.s32 4, %v755
    %v757 = vrot.slane %v727, %v756
    %v758 = vlaneseq
    %v759 = vshrl.u32 %v758, 7
    %v760 = vsub.s32 5, %v759
    %v761 = vrot.slane %v727, %v760
    %v762 = vlaneseq
    %v763 = vshrl.u32 %v762, 7
    %v764 = vsub.s32 6, %v763
    %v765 = vrot.slane %v727, %v764
    %v766 = vlaneseq
    %v767 = vshrl.u32 %v766, 7
    %v768 = vsub.s32 7, %v767
    %v769 = vrot.slane %v727, %v768
    %v770 = vmul.f32 %v86, %v741
    %v771 = vmul.f32 %v119, %v741
    %v772 = vmul.f32 %v152, %v741
    %v773 = vadd.f32 %v81, %v772
    %v774 = vmul.f32 %v90, %v745
    %v775 = vadd.f32 %v770, %v774
    %v776 = vmul.f32 %v123, %v745
    %v777 = vadd.f32 %v771, %v776
    %v778 = vmul.f32 %v156, %v745
    %v779 = vadd.f32 %v773, %v778
    %v780 = vmul.f32 %v94, %v749
    %v781 = vadd.f32 %v775, %v780
    %v782 = vmul.f32 %v127, %v749
    %v783 = vadd.f32 %v777, %v782
    %v784 = vmul.f32 %v160, %v749
    %v785 = vadd.f32 %v779, %v784
    %v786 = vmul.f32 %v98, %v753
    %v787 = vadd.f32 %v781, %v786
    %v788 = vmul.f32 %v131, %v753
    %v789 = vadd.f32 %v783, %v788
    %v790 = vmul.f32 %v164, %v753
    %v791 = vadd.f32 %v785, %v790
    %v792 = vmul.f32 %v102, %v757
    %v793 = vadd.f32 %v787, %v792
    %v794 = vmul.f32 %v135, %v757
    %v795 = vadd.f32 %v789, %v794
    %v796 = vmul.f32 %v168, %v757
    %v797 = vadd.f32 %v791, %v796
    %v798 = vmul.f32 %v106, %v761
    %v799 = vadd.f32 %v793, %v798
    %v800 = vmul.f32 %v139, %v761
    %v801 = vadd.f32 %v795, %v800
    %v802 = vmul.f32 %v172, %v761
    %v803 = vadd.f32 %v797, %v802
    %v804 = vmul.f32 %v110, %v765
    %v805 = vadd.f32 %v799, %v804
    %v806 = vmul.f32 %v143, %v765
    %v807 = vadd.f32 %v801, %v806
    %v808 = vmul.f32 %v176, %v765
    %v809 = vadd.f32 %v803, %v808
    %v810 = vmul.f32 %v114, %v769
    %v811 = vadd.f32 %v805, %v810
    %v812 = vmul.f32 %v147, %v769
    %v813 = vadd.f32 %v807, %v812
    %v814 = vmul.f32 %v180, %v769
    %v815 = vadd.f32 %v809, %v814
    %v816 = vadd.f32 %v733, %v811
    %v817 = vxor.u32 %v816, 2147483648
    %v818 = vmul.f32 %v817, 1.442695
    %v819 = vpow.pop %v818
    %v820 = vadd.f32 %v819, 1.0
    %v821 = vrcp.pop %v820
    %v822 = vmul.f32 1.0, %v821
    %v823 = vadd.f32 %v735, %v813
    %v824 = vxor.u32 %v823, 2147483648
    %v825 = vmul.f32 %v824, 1.442695
    %v826 = vpow.pop %v825
    %v827 = vadd.f32 %v826, 1.0
    %v828 = vrcp.pop %v827
    %v829 = vmul.f32 1.0, %v828
    %v830 = vmul.f32 %v822, %v815
    %v831 = vadd.f32 %v737, %v830
    %v832 = vtanh.pop %v831
    %v833 = vsub.f32 %v727, %v832
    %v834 = vmul.f32 %v829, %v833
    %v835 = vadd.f32 %v832, %v834
    %v836 = vlaneseq
    %v837 = vshrl.u32 %v836, 7
    %v838 = vsub.s32 6, %v837
    %v839 = vrot.slane %v32, %v838
    %v840 = vmul.f32 %v49, %v839
    %v841 = vadd.f32 %v840, %v66
    %v842 = vmul.f32 %v54, %v839
    %v843 = vadd.f32 %v842, %v71
    %v844 = vmul.f32 %v59, %v839
    %v845 = vadd.f32 %v844, %v76
    %v846 = vlaneseq
    %v847 = vshrl.u32 %v846, 7
    %v848 = vsub.s32 0, %v847
    %v849 = vrot.slane %v835, %v848
    %v850 = vlaneseq
    %v851 = vshrl.u32 %v850, 7
    %v852 = vsub.s32 1, %v851
    %v853 = vrot.slane %v835, %v852
    %v854 = vlaneseq
    %v855 = vshrl.u32 %v854, 7
    %v856 = vsub.s32 2, %v855
    %v857 = vrot.slane %v835, %v856
    %v858 = vlaneseq
    %v859 = vshrl.u32 %v858, 7
    %v860 = vsub.s32 3, %v859
    %v861 = vrot.slane %v835, %v860
    %v862 = vlaneseq
    %v863 = vshrl.u32 %v862, 7
    %v864 = vsub.s32 4, %v863
    %v865 = vrot.slane %v835, %v864
    %v866 = vlaneseq
    %v867 = vshrl.u32 %v866, 7
    %v868 = vsub.s32 5, %v867
    %v869 = vrot.slane %v835, %v868
    %v870 = vlaneseq
    %v871 = vshrl.u32 %v870, 7
    %v872 = vsub.s32 6, %v871
    %v873 = vrot.slane %v835, %v872
    %v874 = vlaneseq
    %v875 = vshrl.u32 %v874, 7
    %v876 = vsub.s32 7, %v875
    %v877 = vrot.slane %v835, %v876
    %v878 = vmul.f32 %v86, %v849
    %v879 = vmul.f32 %v119, %v849
    %v880 = vmul.f32 %v152, %v849
    %v881 = vadd.f32 %v81, %v880
    %v882 = vmul.f32 %v90, %v853
    %v883 = vadd.f32 %v878, %v882
    %v884 = vmul.f32 %v123, %v853
    %v885 = vadd.f32 %v879, %v884
    %v886 = vmul.f32 %v156, %v853
    %v887 = vadd.f32 %v881, %v886
    %v888 = vmul.f32 %v94, %v857
    %v889 = vadd.f32 %v883, %v888
    %v890 = vmul.f32 %v127, %v857
    %v891 = vadd.f32 %v885, %v890
    %v892 = vmul.f32 %v160, %v857
    %v893 = vadd.f32 %v887, %v892
    %v894 = vmul.f32 %v98, %v861
    %v895 = vadd.f32 %v889, %v894
    %v896 = vmul.f32 %v131, %v861
    %v897 = vadd.f32 %v891, %v896
    %v898 = vmul.f32 %v164, %v861
    %v899 = vadd.f32 %v893, %v898
    %v900 = vmul.f32 %v102, %v865
    %v901 = vadd.f32 %v895, %v900
    %v902 = vmul.f32 %v135, %v865
    %v903 = vadd.f32 %v897, %v902
    %v904 = vmul.f32 %v168, %v865
    %v905 = vadd.f32 %v899, %v904
    %v906 = vmul.f32 %v106, %v869
    %v907 = vadd.f32 %v901, %v906
    %v908 = vmul.f32 %v139, %v869
    %v909 = vadd.f32 %v903, %v908
    %v910 = vmul.f32 %v172, %v869
    %v911 = vadd.f32 %v905, %v910
    %v912 = vmul.f32 %v110, %v873
    %v913 = vadd.f32 %v907, %v912
    %v914 = vmul.f32 %v143, %v873
    %v915 = vadd.f32 %v909, %v914
    %v916 = vmul.f32 %v176, %v873
    %v917 = vadd.f32 %v911, %v916
    %v918 = vmul.f32 %v114, %v877
    %v919 = vadd.f32 %v913, %v918
    %v920 = vmul.f32 %v147, %v877
    %v921 = vadd.f32 %v915, %v920
    %v922 = vmul.f32 %v180, %v877
    %v923 = vadd.f32 %v917, %v922
    %v924 = vadd.f32 %v841, %v919
    %v925 = vxor.u32 %v924, 2147483648
    %v926 = vmul.f32 %v925, 1.442695
    %v927 = vpow.pop %v926
    %v928 = vadd.f32 %v927, 1.0
    %v929 = vrcp.pop %v928
    %v930 = vmul.f32 1.0, %v929
    %v931 = vadd.f32 %v843, %v921
    %v932 = vxor.u32 %v931, 2147483648
    %v933 = vmul.f32 %v932, 1.442695
    %v934 = vpow.pop %v933
    %v935 = vadd.f32 %v934, 1.0
    %v936 = vrcp.pop %v935
    %v937 = vmul.f32 1.0, %v936
    %v938 = vmul.f32 %v930, %v923
    %v939 = vadd.f32 %v845, %v938
    %v940 = vtanh.pop %v939
    %v941 = vsub.f32 %v835, %v940
    %v942 = vmul.f32 %v937, %v941
    %v943 = vadd.f32 %v940, %v942
    %v944 = vlaneseq
    %v945 = vshrl.u32 %v944, 7
    %v946 = vsub.s32 7, %v945
    %v947 = vrot.slane %v32, %v946
    %v948 = vmul.f32 %v49, %v947
    %v949 = vadd.f32 %v948, %v66
    %v950 = vmul.f32 %v54, %v947
    %v951 = vadd.f32 %v950, %v71
    %v952 = vmul.f32 %v59, %v947
    %v953 = vadd.f32 %v952, %v76
    %v954 = vlaneseq
    %v955 = vshrl.u32 %v954, 7
    %v956 = vsub.s32 0, %v955
    %v957 = vrot.slane %v943, %v956
    %v958 = vlaneseq
    %v959 = vshrl.u32 %v958, 7
    %v960 = vsub.s32 1, %v959
    %v961 = vrot.slane %v943, %v960
    %v962 = vlaneseq
    %v963 = vshrl.u32 %v962, 7
    %v964 = vsub.s32 2, %v963
    %v965 = vrot.slane %v943, %v964
    %v966 = vlaneseq
    %v967 = vshrl.u32 %v966, 7
    %v968 = vsub.s32 3, %v967
    %v969 = vrot.slane %v943, %v968
    %v970 = vlaneseq
    %v971 = vshrl.u32 %v970, 7
    %v972 = vsub.s32 4, %v971
    %v973 = vrot.slane %v943, %v972
    %v974 = vlaneseq
    %v975 = vshrl.u32 %v974, 7
    %v976 = vsub.s32 5, %v975
    %v977 = vrot.slane %v943, %v976
    %v978 = vlaneseq
    %v979 = vshrl.u32 %v978, 7
    %v980 = vsub.s32 6, %v979
    %v981 = vrot.slane %v943, %v980
    %v982 = vlaneseq
    %v983 = vshrl.u32 %v982, 7
    %v984 = vsub.s32 7, %v983
    %v985 = vrot.slane %v943, %v984
    %v986 = vmul.f32 %v86, %v957
    %v987 = vmul.f32 %v119, %v957
    %v988 = vmul.f32 %v152, %v957
    %v989 = vadd.f32 %v81, %v988
    %v990 = vmul.f32 %v90, %v961
    %v991 = vadd.f32 %v986, %v990
    %v992 = vmul.f32 %v123, %v961
    %v993 = vadd.f32 %v987, %v992
    %v994 = vmul.f32 %v156, %v961
    %v995 = vadd.f32 %v989, %v994
    %v996 = vmul.f32 %v94, %v965
    %v997 = vadd.f32 %v991, %v996
    %v998 = vmul.f32 %v127, %v965
    %v999 = vadd.f32 %v993, %v998
    %v1000 = vmul.f32 %v160, %v965
    %v1001 = vadd.f32 %v995, %v1000
    %v1002 = vmul.f32 %v98, %v969
    %v1003 = vadd.f32 %v997, %v1002
    %v1004 = vmul.f32 %v131, %v969
    %v1005 = vadd.f32 %v999, %v1004
    %v1006 = vmul.f32 %v164, %v969
    %v1007 = vadd.f32 %v1001, %v1006
    %v1008 = vmul.f32 %v102, %v973
    %v1009 = vadd.f32 %v1003, %v1008
    %v1010 = vmul.f32 %v135, %v973
    %v1011 = vadd.f32 %v1005, %v1010
    %v1012 = vmul.f32 %v168, %v973
    %v1013 = vadd.f32 %v1007, %v1012
    %v1014 = vmul.f32 %v106, %v977
    %v1015 = vadd.f32 %v1009, %v1014
    %v1016 = vmul.f32 %v139, %v977
    %v1017 = vadd.f32 %v1011, %v1016
    %v1018 = vmul.f32 %v172, %v977
    %v1019 = vadd.f32 %v1013, %v1018
    %v1020 = vmul.f32 %v110, %v981
    %v1021 = vadd.f32 %v1015, %v1020
    %v1022 = vmul.f32 %v143, %v981
    %v1023 = vadd.f32 %v1017, %v1022
    %v1024 = vmul.f32 %v176, %v981
    %v1025 = vadd.f32 %v1019, %v1024
    %v1026 = vmul.f32 %v114, %v985
    %v1027 = vadd.f32 %v1021, %v1026
    %v1028 = vmul.f32 %v147, %v985
    %v1029 = vadd.f32 %v1023, %v1028
    %v1030 = vmul.f32 %v180, %v985
    %v1031 = vadd.f32 %v1025, %v1030
    %v1032 = vadd.f32 %v949, %v1027
    %v1033 = vxor.u32 %v1032, 2147483648
    %v1034 = vmul.f32 %v1033, 1.442695
    %v1035 = vpow.pop %v1034
    %v1036 = vadd.f32 %v1035, 1.0
    %v1037 = vrcp.pop %v1036
    %v1038 = vmul.f32 1.0, %v1037
    %v1039 = vadd.f32 %v951, %v1029
    %v1040 = vxor.u32 %v1039, 2147483648
    %v1041 = vmul.f32 %v1040, 1.442695
    %v1042 = vpow.pop %v1041
    %v1043 = vadd.f32 %v1042, 1.0
    %v1044 = vrcp.pop %v1043
    %v1045 = vmul.f32 1.0, %v1044
    %v1046 = vmul.f32 %v1038, %v1031
    %v1047 = vadd.f32 %v953, %v1046
    %v1048 = vtanh.pop %v1047
    %v1049 = vsub.f32 %v943, %v1048
    %v1050 = vmul.f32 %v1045, %v1049
    %v1051 = vadd.f32 %v1048, %v1050
    %v1052 = vmul.f32 %v1051, %v186
    %vm1053 = vcmask 31744
    %v1054 = vsel %vm1053, %v1052, 0.0
    %v1055 = vrot.slane %v1054, 4
    %v1056 = vadd.f32 %v1054, %v1055
    %v1057 = vrot.slane %v1056, 2
    %v1058 = vadd.f32 %v1056, %v1057
    %v1059 = vrot.slane %v1058, 1
    %v1060 = vadd.f32 %v1058, %v1059
    %v1061 = vld [vmem:[#allocation2] sm:$0x1]
    %1063 = vset.pattern.permute.xlu0 0
    %1064 = vperm.xlu0 %1063, %v1061
    %v1065 = vpop.permute.xlu0 %1064
    %v1067 = vlaneseq
    %v1068 = vshrl.u32 %v1067, 7
    %v1069 = vsub.s32 0, %v1068
    %v1070 = vrot.slane %v1065, %v1069
    %v1071 = vadd.f32 %v1060, %v1070
    %vm1072 = vcmask 24576
    %1073 = vst.msk [vmem:[#allocation3] sm:$0x1] %vm1072, %v1071
    // Predicated region
    $region34: #{tpu_custom_call.1} parent=1 // pred_check
      _
    $region35: #{tpu_custom_call.1} parent=1 // pred_check_branch
      %1075 = sbr.rel (0) target = $region37
    $region36: #{tpu_custom_call.1} parent=1 // pred_region
      %s1077 = ssub.s32 16, 16
      %1078 = vsyncadd [#allocation4], %s1077
      %s1080 = sshll.u32 [#allocation3], 4
      %s1081 = int_to_ptr.vmem [resolvable:$true] %s1080
      %1083 = dma.vmem_to_hbm [thread:$0]  %s1081, 16, %s8, [#allocation4]
    $region37: #{tpu_custom_call.1} parent=1 // pred_fallthru
      _
    // Predicated region
    $region38: #{tpu_custom_call.1} parent=1 // pred_check
      _
    $region39: #{tpu_custom_call.1} parent=1 // pred_check_branch
      %1085 = sbr.rel (0) target = $region41
    $region40: #{tpu_custom_call.1} parent=1 // pred_region
      %1086 = dma.done [#allocation4], 16
    $region41: #{tpu_custom_call.1} parent=1 // pred_fallthru
      _
    %1087 = vsyncpa [#allocation4], 1

</llo_original>
